<compile_context>
chip_gen: v7x
topology: tpu7x:2x2x1
jax: 0.10.0
libtpu: 0.0.40
codegen_flags: <defaults>
</compile_context>

<pallas_src>
import functools
import math

import jax
import jax.numpy as jnp
import numpy as np
from jax.experimental import pallas as pl
from jax.experimental.pallas import tpu as pltpu

EPS = 1e-5


# ------------------------------ fused kernel ----------------------------------

def _lino_fused_kernel(xpad_ref, side_ref, we_ref, be_ref,
                       wl_ref, bl_ref, w1_ref, b1_ref, w2_ref, b2_ref,
                       wp_ref, bp_ref,
                       pred_ref,
                       h_ref, xnpad_ref, da_ref, db_ref,
                       *, ksize, pad, seq_len):
    """Fused LiNo forward for one row tile. grid = (row_tiles, layers)."""
    l = pl.program_id(1)

    # ---- stem (layer step 0 only): RevIN 'norm' + depthwise Filter + embed.
    @pl.when(l == 0)
    def _stem():
        xp = xpad_ref[...]                                   # [R, T+K-1] f32
        rw = side_ref[:, 0:1]                                # RevIN affine w
        rb = side_ref[:, 1:2]                                # RevIN affine b
        inv_T = 1.0 / seq_len
        # pads are zero => sums over the padded slab equal sums over T steps
        mean = jnp.sum(xp, axis=1, keepdims=True) * inv_T
        msq = jnp.sum(xp * xp, axis=1, keepdims=True) * inv_T
        var = jnp.maximum(msq - mean * mean, 0.0)            # moments variance
        inv_std = jax.lax.rsqrt(var + EPS)                   # EUP rsqrt
        std = (var + EPS) * inv_std                          # == sqrt(var+EPS)
        # per-row denorm scale/shift for the head (kills the head divide)
        a = std * pl.reciprocal(rw + EPS * EPS, approx=True)
        da_ref[...] = a
        db_ref[...] = mean - rb * a
        # zero-padded normalized signal (RevIN affine only inside the window)
        col = jax.lax.broadcasted_iota(jnp.int32, xp.shape, 1)
        inside = (col >= pad) & (col < pad + seq_len)
        scale = inv_std * rw                                 # [R,1]
        shift = rb - mean * scale
        xnpad_ref[...] = jnp.where(inside, xp * scale + shift, 0.0)
        # depthwise conv over time; beta already folded into the taps on host.
        # taps read static slices of the VMEM scratch ref, so the padded slab
        # is not kept live 25x as a traced value.
        fw = side_ref[:, 2:2 + ksize]                        # [R, K] (= beta*w)
        filt = jnp.zeros((xp.shape[0], seq_len), jnp.float32)
        for k in range(ksize):
            filt = filt + xnpad_ref[:, k:k + seq_len] * fw[:, k:k + 1]
        x2 = xnpad_ref[:, pad:pad + seq_len] - filt          # x - beta*Filter(x)
        xe = jnp.dot(x2.astype(jnp.bfloat16), we_ref[...],   # [R,T]@[T,D] (MXU)
                     preferred_element_type=jnp.float32) + be_ref[...]
        h_ref[...] = xe

    # ---- encoder layer `l`: Li (linear) + No (GELU MLP on residual);
    #      h stays resident in VMEM, per-layer weights streamed via BlockSpec.
    h = h_ref[...]
    li = jnp.dot(h.astype(jnp.bfloat16), wl_ref[...],
                 preferred_element_type=jnp.float32) + bl_ref[...]
    res = h - li
    z = jnp.dot(res.astype(jnp.bfloat16), w1_ref[...],
                preferred_element_type=jnp.float32) + b1_ref[...]
    z = jax.nn.gelu(z)     # tanh approx (kernel & reference are consistent)
    no = jnp.dot(z.astype(jnp.bfloat16), w2_ref[...],
                 preferred_element_type=jnp.float32) + b2_ref[...]
    h_ref[...] = li + no

    # ---- head (last layer step only): projection + RevIN 'denorm'.
    @pl.when(l == pl.num_programs(1) - 1)
    def _head():
        pred = jnp.dot(h_ref[...].astype(jnp.bfloat16), wp_ref[...],
                       preferred_element_type=jnp.float32) + bp_ref[...]
        pred_ref[...] = pred * da_ref[...] + db_ref[...]


# ------------------------------ wrapper ----------------------------------------

def lino_forward(params, x_btc, beta, *, row_tile=256,
                 vmem_limit_bytes=32 * 1024 * 1024):
    """x_btc: [B, seq_len, enc_in] -> prediction [B, pred_len, enc_in]."""
    B, T, C = x_btc.shape
    N = B * C
    K = params['filter_w'].shape[1]
    pad = K // 2
    Tp = T + 2 * pad
    D = params['embed_w'].shape[1]
    P = params['proj_w'].shape[1]
    enc = params['encoders']
    L = len(enc)
    F = enc[0][2].shape[1]
    bf16 = jnp.bfloat16

    # channel-major rows: row n = b*C + c; pad the time axis once in XLA and
    # pass ONLY the padded slab (single input DMA for the filter/embed stage).
    x_rows = jnp.transpose(x_btc, (0, 2, 1)).reshape(N, T)
    xpad = jnp.pad(x_rows, ((0, 0), (pad, pad)))
    rw_rows = jnp.tile(params['revin_w'], B).reshape(N, 1)
    rb_rows = jnp.tile(params['revin_b'], B).reshape(N, 1)
    fw_rows = beta * jnp.tile(params['filter_w'], (B, 1))      # beta folded in

    # ---- row tiling: pad N up instead of asserting divisibility -------------
    def rup(a, m):
        return ((a + m - 1) // m) * m

    tn = max(8, min(rup(row_tile, 8), rup(N, 8)))
    n_pad = rup(N, tn)
    # give v7x's second TensorCore a row block when everything fits one tile
    if n_pad // tn == 1 and tn > 8 and (tn // 2) % 8 == 0:
        tn //= 2
    if n_pad > N:
        extra = n_pad - N
        xpad = jnp.pad(xpad, ((0, extra), (0, 0)))
        rw_rows = jnp.pad(rw_rows, ((0, extra), (0, 0)), constant_values=1.0)
        rb_rows = jnp.pad(rb_rows, ((0, extra), (0, 0)))
        fw_rows = jnp.pad(fw_rows, ((0, extra), (0, 0)))
    side = jnp.concatenate([rw_rows, rb_rows, fw_rows], axis=1)  # [n_pad, 2+K]

    we = params['embed_w'].astype(bf16)                          # [T, D]
    be = params['embed_b'].reshape(1, D)
    wp = params['proj_w'].astype(bf16)                           # [D, P]
    bp = params['proj_b'].reshape(1, P)

    wl = jnp.stack([e[0] for e in enc]).astype(bf16)             # [L, D, D]
    bl = jnp.stack([e[1] for e in enc]).reshape(L, 1, D)
    w1 = jnp.stack([e[2] for e in enc]).astype(bf16)             # [L, D, F]
    b1 = jnp.stack([e[3] for e in enc]).reshape(L, 1, F)
    w2 = jnp.stack([e[4] for e in enc]).astype(bf16)             # [L, F, D]
    b2 = jnp.stack([e[5] for e in enc]).reshape(L, 1, D)

    grid = (n_pad // tn, L)

    kernel = functools.partial(_lino_fused_kernel, ksize=K, pad=pad, seq_len=T)

    def rows(shape):       # per-row-tile blocks (constant over the layer axis)
        return pl.BlockSpec(shape, lambda n, l: (n, 0))

    def const(shape):      # whole-array blocks (DMA'd once per row tile)
        return pl.BlockSpec(shape, lambda n, l: (0, 0))

    def per_layer(shape):  # stacked [L, ...] weights streamed over the layer axis
        return pl.BlockSpec(shape, lambda n, l: (l, 0, 0))

    pred_rows = pl.pallas_call(
        kernel,
        grid=grid,
        in_specs=[rows((tn, Tp)),
                  rows((tn, 2 + K)),
                  const((T, D)), const((1, D)),
                  per_layer((None, D, D)), per_layer((None, 1, D)),
                  per_layer((None, D, F)), per_layer((None, 1, F)),
                  per_layer((None, F, D)), per_layer((None, 1, D)),
                  const((D, P)), const((1, P))],
        out_specs=rows((tn, P)),
        out_shape=jax.ShapeDtypeStruct((n_pad, P), jnp.float32),
        scratch_shapes=[pltpu.VMEM((tn, D), jnp.float32),    # h (resident acts)
                        pltpu.VMEM((tn, Tp), jnp.float32),   # normalized slab
                        pltpu.VMEM((tn, 1), jnp.float32),    # denorm scale a
                        pltpu.VMEM((tn, 1), jnp.float32)],   # denorm shift b
        compiler_params=pltpu.CompilerParams(
            dimension_semantics=("parallel", "arbitrary"),
            # safe on all gens (v7x has only 64 MiB physical); raise for
            # larger row_tile / seq_len on v5e/v6e (128 MiB physical).
            vmem_limit_bytes=vmem_limit_bytes),
    )(xpad, side, we, be, wl, bl, w1, b1, w2, b2, wp, bp)

    # [n_pad, P] -> [B, pred_len, C]; transpose/slice stay in XLA.
    return jnp.transpose(pred_rows[:N].reshape(B, C, P), (0, 2, 1))


# ------------------------------ reference (f32) --------------------------------

def lino_reference(params, x, beta, ksize=25):
    B, T, C = x.shape
    mean = jnp.mean(x, axis=1, keepdims=True)
    var = jnp.mean((x - mean) ** 2, axis=1, keepdims=True)
    std = jnp.sqrt(var + EPS)
    xn = (x - mean) / std * params['revin_w'] + params['revin_b']
    pad = ksize // 2
    xpad = jnp.pad(xn, ((0, 0), (pad, pad), (0, 0)))
    fw = params['filter_w']                                  # [C, K]
    filt = jnp.zeros_like(xn)
    for k in range(ksize):
        filt = filt + xpad[:, k:k + T, :] * fw[:, k][None, None, :]
    x2 = xn - beta * filt
    xe = jnp.einsum('btc,td->bcd', x2, params['embed_w']) + params['embed_b']
    h = xe.reshape(B * C, -1)
    for (wl, bl, w1, b1, w2, b2) in params['encoders']:
        li = h @ wl + bl
        res = h - li
        hh = jax.nn.gelu(res @ w1 + b1)
        no = hh @ w2 + b2
        h = li + no
    xe_out = h.reshape(B, C, -1)
    pred = jnp.einsum('bcd,dp->bcp', xe_out, params['proj_w']) + params['proj_b']
    pred = jnp.transpose(pred, (0, 2, 1))                    # [B, P, C]
    pred = (pred - params['revin_b']) / (params['revin_w'] + EPS * EPS)
    pred = pred * std + mean
    return pred


# ------------------------------ parameters -------------------------------------

def init_params(key, enc_in, seq_len, pred_len, d_model, d_ff, layers, ksize=25):
    def uniform(k, shape, fan_in):
        bound = 1.0 / math.sqrt(fan_in)
        return jax.random.uniform(k, shape, jnp.float32, -bound, bound)

    keys = jax.random.split(key, 4 + layers)
    params = {
        'revin_w': jnp.ones((enc_in,), jnp.float32),         # RevIN affine init
        'revin_b': jnp.zeros((enc_in,), jnp.float32),
        'filter_w': uniform(keys[0], (enc_in, ksize), ksize),  # depthwise conv
    }
    k_e, k_eb = jax.random.split(keys[1])
    params['embed_w'] = uniform(k_e, (seq_len, d_model), seq_len)
    params['embed_b'] = uniform(k_eb, (d_model,), seq_len)
    k_p, k_pb = jax.random.split(keys[2])
    params['proj_w'] = uniform(k_p, (d_model, pred_len), d_model)
    params['proj_b'] = uniform(k_pb, (pred_len,), d_model)
    encoders = []
    for l in range(layers):
        kk = jax.random.split(keys[3 + l], 6)
        encoders.append((uniform(kk[0], (d_model, d_model), d_model),
                         uniform(kk[1], (d_model,), d_model),
                         uniform(kk[2], (d_model, d_ff), d_model),
                         uniform(kk[3], (d_ff,), d_model),
                         uniform(kk[4], (d_ff, d_model), d_ff),
                         uniform(kk[5], (d_model,), d_ff)))
    params['encoders'] = encoders
    return params


# ---------------------------------- main ----------------------------------------

if __name__ == "__main__":
    # batch, enc_in, seq_len, pred_len, d_model, d_ff, layers
    B, C, T, P, D, F, L = 2, 4, 16, 8, 32, 64, 2
    beta = 0.3
    key = jax.random.PRNGKey(0)
    kx, kp = jax.random.split(key)
    x = jax.random.normal(kx, (B, T, C), jnp.float32)        # [batch, seq_len, enc_in]
    params = init_params(kp, C, T, P, D, F, L)

    fwd = jax.jit(functools.partial(lino_forward, beta=beta))
    pred = jax.block_until_ready(fwd(params, x))

    ref = lino_reference(params, x, beta)
    assert pred.shape == (B, P, C), pred.shape
    # bf16 MXU matmuls + approx recip/rsqrt vs f32 reference -> loose tolerance
    np.testing.assert_allclose(np.asarray(pred), np.asarray(ref),
                               rtol=5e-2, atol=5e-2)
    print("KERNEL_OK")
</pallas_src>

<mosaic_0001>
module attributes {stable_mosaic.version = 11 : i64} {
  func.func @_lino_fused_kernel(%arg0: i32, %arg1: i32, %arg2: memref<8x40xf32, #tpu.memory_space<vmem>>, %arg3: memref<8x27xf32, #tpu.memory_space<vmem>>, %arg4: memref<16x32xbf16, #tpu.memory_space<vmem>>, %arg5: memref<1x32xf32, #tpu.memory_space<vmem>>, %arg6: memref<1x32x32xbf16, #tpu.memory_space<vmem>>, %arg7: memref<1x1x32xf32, #tpu.memory_space<vmem>>, %arg8: memref<1x32x64xbf16, #tpu.memory_space<vmem>>, %arg9: memref<1x1x64xf32, #tpu.memory_space<vmem>>, %arg10: memref<1x64x32xbf16, #tpu.memory_space<vmem>>, %arg11: memref<1x1x32xf32, #tpu.memory_space<vmem>>, %arg12: memref<32x8xbf16, #tpu.memory_space<vmem>>, %arg13: memref<1x8xf32, #tpu.memory_space<vmem>>, %arg14: memref<8x8xf32, #tpu.memory_space<vmem>>, %arg15: memref<8x32xf32, #tpu.memory_space<vmem>>, %arg16: memref<8x40xf32, #tpu.memory_space<vmem>>, %arg17: memref<8x1xf32, #tpu.memory_space<vmem>>, %arg18: memref<8x1xf32, #tpu.memory_space<vmem>>) attributes {dimension_semantics = [#tpu.dimension_semantics<parallel>, #tpu.dimension_semantics<arbitrary>], iteration_bounds = array<i64: 1, 2>, scalar_prefetch = 0 : i64, scratch_operands = 4 : i64, tpu.core_type = #tpu.core_type<tc>, window_params = [{transform_indices = @transform_0, window_bounds = array<i64: 8, 40>}, {transform_indices = @transform_1, window_bounds = array<i64: 8, 27>}, {pipeline_mode = #tpu.pipeline_mode<synchronous>, transform_indices = @transform_2, window_bounds = array<i64: 16, 32>}, {pipeline_mode = #tpu.pipeline_mode<synchronous>, transform_indices = @transform_3, window_bounds = array<i64: 1, 32>}, {transform_indices = @transform_4, window_bounds = array<i64: 1, 32, 32>}, {transform_indices = @transform_5, window_bounds = array<i64: 1, 1, 32>}, {transform_indices = @transform_6, window_bounds = array<i64: 1, 32, 64>}, {transform_indices = @transform_7, window_bounds = array<i64: 1, 1, 64>}, {transform_indices = @transform_8, window_bounds = array<i64: 1, 64, 32>}, {transform_indices = @transform_9, window_bounds = array<i64: 1, 1, 32>}, {pipeline_mode = #tpu.pipeline_mode<synchronous>, transform_indices = @transform_10, window_bounds = array<i64: 32, 8>}, {pipeline_mode = #tpu.pipeline_mode<synchronous>, transform_indices = @transform_11, window_bounds = array<i64: 1, 8>}, {transform_indices = @transform_12, window_bounds = array<i64: 8, 8>}]} {
    %c0_i32 = arith.constant 0 : i32
    %0 = arith.cmpi eq, %arg1, %c0_i32 : i32
    %1 = arith.extui %0 : i1 to i32
    %c0_i32_0 = arith.constant 0 : i32
    %2 = arith.cmpi ne, %1, %c0_i32_0 : i32
    scf.if %2 {
      %c0_29 = arith.constant 0 : index
      %c0_30 = arith.constant 0 : index
      %47 = vector.load %arg2[%c0_29, %c0_30] : memref<8x40xf32, #tpu.memory_space<vmem>>, vector<8x40xf32>
      %c0_31 = arith.constant 0 : index
      %c0_32 = arith.constant 0 : index
      %48 = vector.load %arg3[%c0_31, %c0_32] : memref<8x27xf32, #tpu.memory_space<vmem>>, vector<8x1xf32>
      %c0_33 = arith.constant 0 : index
      %c1 = arith.constant 1 : index
      %49 = vector.load %arg3[%c0_33, %c1] : memref<8x27xf32, #tpu.memory_space<vmem>>, vector<8x1xf32>
      %cst_34 = arith.constant dense<0.000000e+00> : vector<8xf32>
      %50 = vector.multi_reduction <add>, %47, %cst_34 [1] : vector<8x40xf32> to vector<8xf32>
      %51 = vector.shape_cast %50 : vector<8xf32> to vector<8x1xf32>
      %cst_35 = arith.constant 6.250000e-02 : f32
      %52 = vector.broadcast %cst_35 : f32 to vector<8x1xf32>
      %53 = arith.mulf %51, %52 : vector<8x1xf32>
      %54 = arith.mulf %47, %47 : vector<8x40xf32>
      %cst_36 = arith.constant dense<0.000000e+00> : vector<8xf32>
      %55 = vector.multi_reduction <add>, %54, %cst_36 [1] : vector<8x40xf32> to vector<8xf32>
      %56 = vector.shape_cast %55 : vector<8xf32> to vector<8x1xf32>
      %cst_37 = arith.constant 6.250000e-02 : f32
      %57 = vector.broadcast %cst_37 : f32 to vector<8x1xf32>
      %58 = arith.mulf %56, %57 : vector<8x1xf32>
      %59 = arith.mulf %53, %53 : vector<8x1xf32>
      %60 = arith.subf %58, %59 : vector<8x1xf32>
      %cst_38 = arith.constant 0.000000e+00 : f32
      %61 = vector.broadcast %cst_38 : f32 to vector<8x1xf32>
      %62 = arith.maximumf %60, %61 : vector<8x1xf32>
      %cst_39 = arith.constant 9.99999974E-6 : f32
      %63 = vector.broadcast %cst_39 : f32 to vector<8x1xf32>
      %64 = arith.addf %62, %63 : vector<8x1xf32>
      %65 = math.rsqrt %64 : vector<8x1xf32>
      %cst_40 = arith.constant 9.99999974E-6 : f32
      %66 = vector.broadcast %cst_40 : f32 to vector<8x1xf32>
      %67 = arith.addf %62, %66 : vector<8x1xf32>
      %68 = arith.mulf %67, %65 : vector<8x1xf32>
      %cst_41 = arith.constant 1.000000e-10 : f32
      %69 = vector.broadcast %cst_41 : f32 to vector<8x1xf32>
      %70 = arith.addf %48, %69 : vector<8x1xf32>
      %71 = tpu.reciprocal %70 {approx = true} : vector<8x1xf32> -> vector<8x1xf32>
      %72 = arith.mulf %68, %71 : vector<8x1xf32>
      %c0_42 = arith.constant 0 : index
      %c0_43 = arith.constant 0 : index
      %73 = vector.load %arg17[%c0_42, %c0_43] : memref<8x1xf32, #tpu.memory_space<vmem>>, vector<8x1xf32>
      tpu.vector_store %arg17[%c0_42, %c0_43], %72 {strides = array<i32>} : memref<8x1xf32, #tpu.memory_space<vmem>>, vector<8x1xf32>,
      %74 = arith.mulf %49, %72 : vector<8x1xf32>
      %75 = arith.subf %53, %74 : vector<8x1xf32>
      %c0_44 = arith.constant 0 : index
      %c0_45 = arith.constant 0 : index
      %76 = vector.load %arg18[%c0_44, %c0_45] : memref<8x1xf32, #tpu.memory_space<vmem>>, vector<8x1xf32>
      tpu.vector_store %arg18[%c0_44, %c0_45], %75 {strides = array<i32>} : memref<8x1xf32, #tpu.memory_space<vmem>>, vector<8x1xf32>,
      %77 = tpu.iota {dimensions = array<i32: 1>} : vector<8x40xi32>
      %c12_i32 = arith.constant 12 : i32
      %78 = vector.broadcast %c12_i32 : i32 to vector<8x40xi32>
      %79 = arith.cmpi sge, %77, %78 : vector<8x40xi32>
      %c28_i32 = arith.constant 28 : i32
      %80 = vector.broadcast %c28_i32 : i32 to vector<8x40xi32>
      %81 = arith.cmpi slt, %77, %80 : vector<8x40xi32>
      %82 = arith.andi %79, %81 : vector<8x40xi1>
      %83 = arith.mulf %65, %48 : vector<8x1xf32>
      %84 = arith.mulf %53, %83 : vector<8x1xf32>
      %85 = arith.subf %49, %84 : vector<8x1xf32>
      %86 = vector.broadcast %83 : vector<8x1xf32> to vector<8x40xf32>
      %87 = arith.mulf %47, %86 : vector<8x40xf32>
      %88 = vector.broadcast %85 : vector<8x1xf32> to vector<8x40xf32>
      %89 = arith.addf %87, %88 : vector<8x40xf32>
      %cst_46 = arith.constant 0.000000e+00 : f32
      %90 = vector.broadcast %cst_46 : f32 to vector<8x40xf32>
      %91 = arith.select %82, %89, %90 : vector<8x40xi1>, vector<8x40xf32>
      %c0_47 = arith.constant 0 : index
      %c0_48 = arith.constant 0 : index
      %92 = vector.load %arg16[%c0_47, %c0_48] : memref<8x40xf32, #tpu.memory_space<vmem>>, vector<8x40xf32>
      tpu.vector_store %arg16[%c0_47, %c0_48], %91 {strides = array<i32>} : memref<8x40xf32, #tpu.memory_space<vmem>>, vector<8x40xf32>,
      %c0_49 = arith.constant 0 : index
      %c2 = arith.constant 2 : index
      %93 = vector.load %arg3[%c0_49, %c2] : memref<8x27xf32, #tpu.memory_space<vmem>>, vector<8x25xf32>
      %cst_50 = arith.constant 0.000000e+00 : f32
      %94 = vector.broadcast %cst_50 : f32 to vector<8x16xf32>
      %c0_51 = arith.constant 0 : index
      %c0_52 = arith.constant 0 : index
      %95 = vector.load %arg16[%c0_51, %c0_52] : memref<8x40xf32, #tpu.memory_space<vmem>>, vector<8x16xf32>
      %96 = vector.extract_strided_slice %93 {offsets = [0, 0], sizes = [8, 1], strides = [1, 1]} : vector<8x25xf32> to vector<8x1xf32>
      %97 = vector.broadcast %96 : vector<8x1xf32> to vector<8x16xf32>
      %98 = arith.mulf %95, %97 : vector<8x16xf32>
      %99 = arith.addf %94, %98 : vector<8x16xf32>
      %c0_53 = arith.constant 0 : index
      %c1_54 = arith.constant 1 : index
      %100 = vector.load %arg16[%c0_53, %c1_54] : memref<8x40xf32, #tpu.memory_space<vmem>>, vector<8x16xf32>
      %101 = vector.extract_strided_slice %93 {offsets = [0, 1], sizes = [8, 1], strides = [1, 1]} : vector<8x25xf32> to vector<8x1xf32>
      %102 = vector.broadcast %101 : vector<8x1xf32> to vector<8x16xf32>
      %103 = arith.mulf %100, %102 : vector<8x16xf32>
      %104 = arith.addf %99, %103 : vector<8x16xf32>
      %c0_55 = arith.constant 0 : index
      %c2_56 = arith.constant 2 : index
      %105 = vector.load %arg16[%c0_55, %c2_56] : memref<8x40xf32, #tpu.memory_space<vmem>>, vector<8x16xf32>
      %106 = vector.extract_strided_slice %93 {offsets = [0, 2], sizes = [8, 1], strides = [1, 1]} : vector<8x25xf32> to vector<8x1xf32>
      %107 = vector.broadcast %106 : vector<8x1xf32> to vector<8x16xf32>
      %108 = arith.mulf %105, %107 : vector<8x16xf32>
      %109 = arith.addf %104, %108 : vector<8x16xf32>
      %c0_57 = arith.constant 0 : index
      %c3 = arith.constant 3 : index
      %110 = vector.load %arg16[%c0_57, %c3] : memref<8x40xf32, #tpu.memory_space<vmem>>, vector<8x16xf32>
      %111 = vector.extract_strided_slice %93 {offsets = [0, 3], sizes = [8, 1], strides = [1, 1]} : vector<8x25xf32> to vector<8x1xf32>
      %112 = vector.broadcast %111 : vector<8x1xf32> to vector<8x16xf32>
      %113 = arith.mulf %110, %112 : vector<8x16xf32>
      %114 = arith.addf %109, %113 : vector<8x16xf32>
      %c0_58 = arith.constant 0 : index
      %c4 = arith.constant 4 : index
      %115 = vector.load %arg16[%c0_58, %c4] : memref<8x40xf32, #tpu.memory_space<vmem>>, vector<8x16xf32>
      %116 = vector.extract_strided_slice %93 {offsets = [0, 4], sizes = [8, 1], strides = [1, 1]} : vector<8x25xf32> to vector<8x1xf32>
      %117 = vector.broadcast %116 : vector<8x1xf32> to vector<8x16xf32>
      %118 = arith.mulf %115, %117 : vector<8x16xf32>
      %119 = arith.addf %114, %118 : vector<8x16xf32>
      %c0_59 = arith.constant 0 : index
      %c5 = arith.constant 5 : index
      %120 = vector.load %arg16[%c0_59, %c5] : memref<8x40xf32, #tpu.memory_space<vmem>>, vector<8x16xf32>
      %121 = vector.extract_strided_slice %93 {offsets = [0, 5], sizes = [8, 1], strides = [1, 1]} : vector<8x25xf32> to vector<8x1xf32>
      %122 = vector.broadcast %121 : vector<8x1xf32> to vector<8x16xf32>
      %123 = arith.mulf %120, %122 : vector<8x16xf32>
      %124 = arith.addf %119, %123 : vector<8x16xf32>
      %c0_60 = arith.constant 0 : index
      %c6 = arith.constant 6 : index
      %125 = vector.load %arg16[%c0_60, %c6] : memref<8x40xf32, #tpu.memory_space<vmem>>, vector<8x16xf32>
      %126 = vector.extract_strided_slice %93 {offsets = [0, 6], sizes = [8, 1], strides = [1, 1]} : vector<8x25xf32> to vector<8x1xf32>
      %127 = vector.broadcast %126 : vector<8x1xf32> to vector<8x16xf32>
      %128 = arith.mulf %125, %127 : vector<8x16xf32>
      %129 = arith.addf %124, %128 : vector<8x16xf32>
      %c0_61 = arith.constant 0 : index
      %c7 = arith.constant 7 : index
      %130 = vector.load %arg16[%c0_61, %c7] : memref<8x40xf32, #tpu.memory_space<vmem>>, vector<8x16xf32>
      %131 = vector.extract_strided_slice %93 {offsets = [0, 7], sizes = [8, 1], strides = [1, 1]} : vector<8x25xf32> to vector<8x1xf32>
      %132 = vector.broadcast %131 : vector<8x1xf32> to vector<8x16xf32>
      %133 = arith.mulf %130, %132 : vector<8x16xf32>
      %134 = arith.addf %129, %133 : vector<8x16xf32>
      %c0_62 = arith.constant 0 : index
      %c8 = arith.constant 8 : index
      %135 = vector.load %arg16[%c0_62, %c8] : memref<8x40xf32, #tpu.memory_space<vmem>>, vector<8x16xf32>
      %136 = vector.extract_strided_slice %93 {offsets = [0, 8], sizes = [8, 1], strides = [1, 1]} : vector<8x25xf32> to vector<8x1xf32>
      %137 = vector.broadcast %136 : vector<8x1xf32> to vector<8x16xf32>
      %138 = arith.mulf %135, %137 : vector<8x16xf32>
      %139 = arith.addf %134, %138 : vector<8x16xf32>
      %c0_63 = arith.constant 0 : index
      %c9 = arith.constant 9 : index
      %140 = vector.load %arg16[%c0_63, %c9] : memref<8x40xf32, #tpu.memory_space<vmem>>, vector<8x16xf32>
      %141 = vector.extract_strided_slice %93 {offsets = [0, 9], sizes = [8, 1], strides = [1, 1]} : vector<8x25xf32> to vector<8x1xf32>
      %142 = vector.broadcast %141 : vector<8x1xf32> to vector<8x16xf32>
      %143 = arith.mulf %140, %142 : vector<8x16xf32>
      %144 = arith.addf %139, %143 : vector<8x16xf32>
      %c0_64 = arith.constant 0 : index
      %c10 = arith.constant 10 : index
      %145 = vector.load %arg16[%c0_64, %c10] : memref<8x40xf32, #tpu.memory_space<vmem>>, vector<8x16xf32>
      %146 = vector.extract_strided_slice %93 {offsets = [0, 10], sizes = [8, 1], strides = [1, 1]} : vector<8x25xf32> to vector<8x1xf32>
      %147 = vector.broadcast %146 : vector<8x1xf32> to vector<8x16xf32>
      %148 = arith.mulf %145, %147 : vector<8x16xf32>
      %149 = arith.addf %144, %148 : vector<8x16xf32>
      %c0_65 = arith.constant 0 : index
      %c11 = arith.constant 11 : index
      %150 = vector.load %arg16[%c0_65, %c11] : memref<8x40xf32, #tpu.memory_space<vmem>>, vector<8x16xf32>
      %151 = vector.extract_strided_slice %93 {offsets = [0, 11], sizes = [8, 1], strides = [1, 1]} : vector<8x25xf32> to vector<8x1xf32>
      %152 = vector.broadcast %151 : vector<8x1xf32> to vector<8x16xf32>
      %153 = arith.mulf %150, %152 : vector<8x16xf32>
      %154 = arith.addf %149, %153 : vector<8x16xf32>
      %c0_66 = arith.constant 0 : index
      %c12 = arith.constant 12 : index
      %155 = vector.load %arg16[%c0_66, %c12] : memref<8x40xf32, #tpu.memory_space<vmem>>, vector<8x16xf32>
      %156 = vector.extract_strided_slice %93 {offsets = [0, 12], sizes = [8, 1], strides = [1, 1]} : vector<8x25xf32> to vector<8x1xf32>
      %157 = vector.broadcast %156 : vector<8x1xf32> to vector<8x16xf32>
      %158 = arith.mulf %155, %157 : vector<8x16xf32>
      %159 = arith.addf %154, %158 : vector<8x16xf32>
      %c0_67 = arith.constant 0 : index
      %c13 = arith.constant 13 : index
      %160 = vector.load %arg16[%c0_67, %c13] : memref<8x40xf32, #tpu.memory_space<vmem>>, vector<8x16xf32>
      %161 = vector.extract_strided_slice %93 {offsets = [0, 13], sizes = [8, 1], strides = [1, 1]} : vector<8x25xf32> to vector<8x1xf32>
      %162 = vector.broadcast %161 : vector<8x1xf32> to vector<8x16xf32>
      %163 = arith.mulf %160, %162 : vector<8x16xf32>
      %164 = arith.addf %159, %163 : vector<8x16xf32>
      %c0_68 = arith.constant 0 : index
      %c14 = arith.constant 14 : index
      %165 = vector.load %arg16[%c0_68, %c14] : memref<8x40xf32, #tpu.memory_space<vmem>>, vector<8x16xf32>
      %166 = vector.extract_strided_slice %93 {offsets = [0, 14], sizes = [8, 1], strides = [1, 1]} : vector<8x25xf32> to vector<8x1xf32>
      %167 = vector.broadcast %166 : vector<8x1xf32> to vector<8x16xf32>
      %168 = arith.mulf %165, %167 : vector<8x16xf32>
      %169 = arith.addf %164, %168 : vector<8x16xf32>
      %c0_69 = arith.constant 0 : index
      %c15 = arith.constant 15 : index
      %170 = vector.load %arg16[%c0_69, %c15] : memref<8x40xf32, #tpu.memory_space<vmem>>, vector<8x16xf32>
      %171 = vector.extract_strided_slice %93 {offsets = [0, 15], sizes = [8, 1], strides = [1, 1]} : vector<8x25xf32> to vector<8x1xf32>
      %172 = vector.broadcast %171 : vector<8x1xf32> to vector<8x16xf32>
      %173 = arith.mulf %170, %172 : vector<8x16xf32>
      %174 = arith.addf %169, %173 : vector<8x16xf32>
      %c0_70 = arith.constant 0 : index
      %c16 = arith.constant 16 : index
      %175 = vector.load %arg16[%c0_70, %c16] : memref<8x40xf32, #tpu.memory_space<vmem>>, vector<8x16xf32>
      %176 = vector.extract_strided_slice %93 {offsets = [0, 16], sizes = [8, 1], strides = [1, 1]} : vector<8x25xf32> to vector<8x1xf32>
      %177 = vector.broadcast %176 : vector<8x1xf32> to vector<8x16xf32>
      %178 = arith.mulf %175, %177 : vector<8x16xf32>
      %179 = arith.addf %174, %178 : vector<8x16xf32>
      %c0_71 = arith.constant 0 : index
      %c17 = arith.constant 17 : index
      %180 = vector.load %arg16[%c0_71, %c17] : memref<8x40xf32, #tpu.memory_space<vmem>>, vector<8x16xf32>
      %181 = vector.extract_strided_slice %93 {offsets = [0, 17], sizes = [8, 1], strides = [1, 1]} : vector<8x25xf32> to vector<8x1xf32>
      %182 = vector.broadcast %181 : vector<8x1xf32> to vector<8x16xf32>
      %183 = arith.mulf %180, %182 : vector<8x16xf32>
      %184 = arith.addf %179, %183 : vector<8x16xf32>
      %c0_72 = arith.constant 0 : index
      %c18 = arith.constant 18 : index
      %185 = vector.load %arg16[%c0_72, %c18] : memref<8x40xf32, #tpu.memory_space<vmem>>, vector<8x16xf32>
      %186 = vector.extract_strided_slice %93 {offsets = [0, 18], sizes = [8, 1], strides = [1, 1]} : vector<8x25xf32> to vector<8x1xf32>
      %187 = vector.broadcast %186 : vector<8x1xf32> to vector<8x16xf32>
      %188 = arith.mulf %185, %187 : vector<8x16xf32>
      %189 = arith.addf %184, %188 : vector<8x16xf32>
      %c0_73 = arith.constant 0 : index
      %c19 = arith.constant 19 : index
      %190 = vector.load %arg16[%c0_73, %c19] : memref<8x40xf32, #tpu.memory_space<vmem>>, vector<8x16xf32>
      %191 = vector.extract_strided_slice %93 {offsets = [0, 19], sizes = [8, 1], strides = [1, 1]} : vector<8x25xf32> to vector<8x1xf32>
      %192 = vector.broadcast %191 : vector<8x1xf32> to vector<8x16xf32>
      %193 = arith.mulf %190, %192 : vector<8x16xf32>
      %194 = arith.addf %189, %193 : vector<8x16xf32>
      %c0_74 = arith.constant 0 : index
      %c20 = arith.constant 20 : index
      %195 = vector.load %arg16[%c0_74, %c20] : memref<8x40xf32, #tpu.memory_space<vmem>>, vector<8x16xf32>
      %196 = vector.extract_strided_slice %93 {offsets = [0, 20], sizes = [8, 1], strides = [1, 1]} : vector<8x25xf32> to vector<8x1xf32>
      %197 = vector.broadcast %196 : vector<8x1xf32> to vector<8x16xf32>
      %198 = arith.mulf %195, %197 : vector<8x16xf32>
      %199 = arith.addf %194, %198 : vector<8x16xf32>
      %c0_75 = arith.constant 0 : index
      %c21 = arith.constant 21 : index
      %200 = vector.load %arg16[%c0_75, %c21] : memref<8x40xf32, #tpu.memory_space<vmem>>, vector<8x16xf32>
      %201 = vector.extract_strided_slice %93 {offsets = [0, 21], sizes = [8, 1], strides = [1, 1]} : vector<8x25xf32> to vector<8x1xf32>
      %202 = vector.broadcast %201 : vector<8x1xf32> to vector<8x16xf32>
      %203 = arith.mulf %200, %202 : vector<8x16xf32>
      %204 = arith.addf %199, %203 : vector<8x16xf32>
      %c0_76 = arith.constant 0 : index
      %c22 = arith.constant 22 : index
      %205 = vector.load %arg16[%c0_76, %c22] : memref<8x40xf32, #tpu.memory_space<vmem>>, vector<8x16xf32>
      %206 = vector.extract_strided_slice %93 {offsets = [0, 22], sizes = [8, 1], strides = [1, 1]} : vector<8x25xf32> to vector<8x1xf32>
      %207 = vector.broadcast %206 : vector<8x1xf32> to vector<8x16xf32>
      %208 = arith.mulf %205, %207 : vector<8x16xf32>
      %209 = arith.addf %204, %208 : vector<8x16xf32>
      %c0_77 = arith.constant 0 : index
      %c23 = arith.constant 23 : index
      %210 = vector.load %arg16[%c0_77, %c23] : memref<8x40xf32, #tpu.memory_space<vmem>>, vector<8x16xf32>
      %211 = vector.extract_strided_slice %93 {offsets = [0, 23], sizes = [8, 1], strides = [1, 1]} : vector<8x25xf32> to vector<8x1xf32>
      %212 = vector.broadcast %211 : vector<8x1xf32> to vector<8x16xf32>
      %213 = arith.mulf %210, %212 : vector<8x16xf32>
      %214 = arith.addf %209, %213 : vector<8x16xf32>
      %c0_78 = arith.constant 0 : index
      %c24 = arith.constant 24 : index
      %215 = vector.load %arg16[%c0_78, %c24] : memref<8x40xf32, #tpu.memory_space<vmem>>, vector<8x16xf32>
      %216 = vector.extract_strided_slice %93 {offsets = [0, 24], sizes = [8, 1], strides = [1, 1]} : vector<8x25xf32> to vector<8x1xf32>
      %217 = vector.broadcast %216 : vector<8x1xf32> to vector<8x16xf32>
      %218 = arith.mulf %215, %217 : vector<8x16xf32>
      %219 = arith.addf %214, %218 : vector<8x16xf32>
      %c0_79 = arith.constant 0 : index
      %c12_80 = arith.constant 12 : index
      %220 = vector.load %arg16[%c0_79, %c12_80] : memref<8x40xf32, #tpu.memory_space<vmem>>, vector<8x16xf32>
      %221 = arith.subf %220, %219 : vector<8x16xf32>
      %222 = arith.truncf %221 : vector<8x16xf32> to vector<8x16xbf16>
      %c0_81 = arith.constant 0 : index
      %c0_82 = arith.constant 0 : index
      %223 = vector.load %arg4[%c0_81, %c0_82] : memref<16x32xbf16, #tpu.memory_space<vmem>>, vector<16x32xbf16>
      %cst_83 = arith.constant dense<0.000000e+00> : vector<8x32xf32>
      %224 = tpu.matmul %222, %223, %cst_83 {dimension_numbers = #tpu.dot_dimension_numbers<[1], [0], [0], [1], [0, 0, 1, 1], [], []>} : vector<8x16xbf16>, vector<16x32xbf16>, vector<8x32xf32> -> vector<8x32xf32>
      %c0_84 = arith.constant 0 : index
      %c0_85 = arith.constant 0 : index
      %225 = vector.load %arg5[%c0_84, %c0_85] : memref<1x32xf32, #tpu.memory_space<vmem>>, vector<1x32xf32>
      %226 = vector.broadcast %225 : vector<1x32xf32> to vector<8x32xf32>
      %227 = arith.addf %224, %226 : vector<8x32xf32>
      %c0_86 = arith.constant 0 : index
      %c0_87 = arith.constant 0 : index
      %228 = vector.load %arg15[%c0_86, %c0_87] : memref<8x32xf32, #tpu.memory_space<vmem>>, vector<8x32xf32>
      tpu.vector_store %arg15[%c0_86, %c0_87], %227 {strides = array<i32>} : memref<8x32xf32, #tpu.memory_space<vmem>>, vector<8x32xf32>,
    } else {
    }
    %c0 = arith.constant 0 : index
    %c0_1 = arith.constant 0 : index
    %3 = vector.load %arg15[%c0, %c0_1] : memref<8x32xf32, #tpu.memory_space<vmem>>, vector<8x32xf32>
    %4 = arith.truncf %3 : vector<8x32xf32> to vector<8x32xbf16>
    %c0_2 = arith.constant 0 : index
    %c0_3 = arith.constant 0 : index
    %c0_4 = arith.constant 0 : index
    %5 = vector.load %arg6[%c0_2, %c0_3, %c0_4] : memref<1x32x32xbf16, #tpu.memory_space<vmem>>, vector<1x32x32xbf16>
    %6 = vector.shape_cast %5 : vector<1x32x32xbf16> to vector<32x32xbf16>
    %cst = arith.constant dense<0.000000e+00> : vector<8x32xf32>
    %7 = tpu.matmul %4, %6, %cst {dimension_numbers = #tpu.dot_dimension_numbers<[1], [0], [0], [1], [0, 0, 1, 1], [], []>} : vector<8x32xbf16>, vector<32x32xbf16>, vector<8x32xf32> -> vector<8x32xf32>
    %c0_5 = arith.constant 0 : index
    %c0_6 = arith.constant 0 : index
    %c0_7 = arith.constant 0 : index
    %8 = vector.load %arg7[%c0_5, %c0_6, %c0_7] : memref<1x1x32xf32, #tpu.memory_space<vmem>>, vector<1x1x32xf32>
    %9 = vector.shape_cast %8 : vector<1x1x32xf32> to vector<1x32xf32>
    %10 = vector.broadcast %9 : vector<1x32xf32> to vector<8x32xf32>
    %11 = arith.addf %7, %10 : vector<8x32xf32>
    %12 = arith.subf %3, %11 : vector<8x32xf32>
    %13 = arith.truncf %12 : vector<8x32xf32> to vector<8x32xbf16>
    %c0_8 = arith.constant 0 : index
    %c0_9 = arith.constant 0 : index
    %c0_10 = arith.constant 0 : index
    %14 = vector.load %arg8[%c0_8, %c0_9, %c0_10] : memref<1x32x64xbf16, #tpu.memory_space<vmem>>, vector<1x32x64xbf16>
    %15 = vector.shape_cast %14 : vector<1x32x64xbf16> to vector<32x64xbf16>
    %cst_11 = arith.constant dense<0.000000e+00> : vector<8x64xf32>
    %16 = tpu.matmul %13, %15, %cst_11 {dimension_numbers = #tpu.dot_dimension_numbers<[1], [0], [0], [1], [0, 0, 1, 1], [], []>} : vector<8x32xbf16>, vector<32x64xbf16>, vector<8x64xf32> -> vector<8x64xf32>
    %c0_12 = arith.constant 0 : index
    %c0_13 = arith.constant 0 : index
    %c0_14 = arith.constant 0 : index
    %17 = vector.load %arg9[%c0_12, %c0_13, %c0_14] : memref<1x1x64xf32, #tpu.memory_space<vmem>>, vector<1x1x64xf32>
    %18 = vector.shape_cast %17 : vector<1x1x64xf32> to vector<1x64xf32>
    %19 = vector.broadcast %18 : vector<1x64xf32> to vector<8x64xf32>
    %20 = arith.addf %16, %19 : vector<8x64xf32>
    %21 = arith.mulf %20, %20 : vector<8x64xf32>
    %22 = arith.mulf %20, %21 : vector<8x64xf32>
    %cst_15 = arith.constant 4.471500e-02 : f32
    %23 = vector.broadcast %cst_15 : f32 to vector<8x64xf32>
    %24 = arith.mulf %23, %22 : vector<8x64xf32>
    %25 = arith.addf %20, %24 : vector<8x64xf32>
    %cst_16 = arith.constant 0.797884583 : f32
    %26 = vector.broadcast %cst_16 : f32 to vector<8x64xf32>
    %27 = arith.mulf %26, %25 : vector<8x64xf32>
    %28 = math.tanh %27 : vector<8x64xf32>
    %cst_17 = arith.constant 1.000000e+00 : f32
    %29 = vector.broadcast %cst_17 : f32 to vector<8x64xf32>
    %30 = arith.addf %29, %28 : vector<8x64xf32>
    %cst_18 = arith.constant 5.000000e-01 : f32
    %31 = vector.broadcast %cst_18 : f32 to vector<8x64xf32>
    %32 = arith.mulf %31, %30 : vector<8x64xf32>
    %33 = arith.mulf %20, %32 : vector<8x64xf32>
    %34 = arith.truncf %33 : vector<8x64xf32> to vector<8x64xbf16>
    %c0_19 = arith.constant 0 : index
    %c0_20 = arith.constant 0 : index
    %c0_21 = arith.constant 0 : index
    %35 = vector.load %arg10[%c0_19, %c0_20, %c0_21] : memref<1x64x32xbf16, #tpu.memory_space<vmem>>, vector<1x64x32xbf16>
    %36 = vector.shape_cast %35 : vector<1x64x32xbf16> to vector<64x32xbf16>
    %cst_22 = arith.constant dense<0.000000e+00> : vector<8x32xf32>
    %37 = tpu.matmul %34, %36, %cst_22 {dimension_numbers = #tpu.dot_dimension_numbers<[1], [0], [0], [1], [0, 0, 1, 1], [], []>} : vector<8x64xbf16>, vector<64x32xbf16>, vector<8x32xf32> -> vector<8x32xf32>
    %c0_23 = arith.constant 0 : index
    %c0_24 = arith.constant 0 : index
    %c0_25 = arith.constant 0 : index
    %38 = vector.load %arg11[%c0_23, %c0_24, %c0_25] : memref<1x1x32xf32, #tpu.memory_space<vmem>>, vector<1x1x32xf32>
    %39 = vector.shape_cast %38 : vector<1x1x32xf32> to vector<1x32xf32>
    %40 = vector.broadcast %39 : vector<1x32xf32> to vector<8x32xf32>
    %41 = arith.addf %37, %40 : vector<8x32xf32>
    %42 = arith.addf %11, %41 : vector<8x32xf32>
    %c0_26 = arith.constant 0 : index
    %c0_27 = arith.constant 0 : index
    %43 = vector.load %arg15[%c0_26, %c0_27] : memref<8x32xf32, #tpu.memory_space<vmem>>, vector<8x32xf32>
    tpu.vector_store %arg15[%c0_26, %c0_27], %42 {strides = array<i32>} : memref<8x32xf32, #tpu.memory_space<vmem>>, vector<8x32xf32>,
    %c1_i32 = arith.constant 1 : i32
    %44 = arith.cmpi eq, %arg1, %c1_i32 : i32
    %45 = arith.extui %44 : i1 to i32
    %c0_i32_28 = arith.constant 0 : i32
    %46 = arith.cmpi ne, %45, %c0_i32_28 : i32
    scf.if %46 {
      %c0_29 = arith.constant 0 : index
      %c0_30 = arith.constant 0 : index
      %47 = vector.load %arg15[%c0_29, %c0_30] : memref<8x32xf32, #tpu.memory_space<vmem>>, vector<8x32xf32>
      %48 = arith.truncf %47 : vector<8x32xf32> to vector<8x32xbf16>
      %c0_31 = arith.constant 0 : index
      %c0_32 = arith.constant 0 : index
      %49 = vector.load %arg12[%c0_31, %c0_32] : memref<32x8xbf16, #tpu.memory_space<vmem>>, vector<32x8xbf16>
      %cst_33 = arith.constant dense<0.000000e+00> : vector<8x8xf32>
      %50 = tpu.matmul %48, %49, %cst_33 {dimension_numbers = #tpu.dot_dimension_numbers<[1], [0], [0], [1], [0, 0, 1, 1], [], []>} : vector<8x32xbf16>, vector<32x8xbf16>, vector<8x8xf32> -> vector<8x8xf32>
      %c0_34 = arith.constant 0 : index
      %c0_35 = arith.constant 0 : index
      %51 = vector.load %arg13[%c0_34, %c0_35] : memref<1x8xf32, #tpu.memory_space<vmem>>, vector<1x8xf32>
      %52 = vector.broadcast %51 : vector<1x8xf32> to vector<8x8xf32>
      %53 = arith.addf %50, %52 : vector<8x8xf32>
      %c0_36 = arith.constant 0 : index
      %c0_37 = arith.constant 0 : index
      %54 = vector.load %arg17[%c0_36, %c0_37] : memref<8x1xf32, #tpu.memory_space<vmem>>, vector<8x1xf32>
      %55 = vector.broadcast %54 : vector<8x1xf32> to vector<8x8xf32>
      %56 = arith.mulf %53, %55 : vector<8x8xf32>
      %c0_38 = arith.constant 0 : index
      %c0_39 = arith.constant 0 : index
      %57 = vector.load %arg18[%c0_38, %c0_39] : memref<8x1xf32, #tpu.memory_space<vmem>>, vector<8x1xf32>
      %58 = vector.broadcast %57 : vector<8x1xf32> to vector<8x8xf32>
      %59 = arith.addf %56, %58 : vector<8x8xf32>
      %c0_40 = arith.constant 0 : index
      %c0_41 = arith.constant 0 : index
      %60 = vector.load %arg14[%c0_40, %c0_41] : memref<8x8xf32, #tpu.memory_space<vmem>>, vector<8x8xf32>
      tpu.vector_store %arg14[%c0_40, %c0_41], %59 {strides = array<i32>} : memref<8x8xf32, #tpu.memory_space<vmem>>, vector<8x8xf32>,
    } else {
    }
    return
  }
  func.func @transform_0(%arg0: i32, %arg1: i32) -> (i32, i32) {
    %c0_i32 = arith.constant 0 : i32
    %c0_i32_0 = arith.constant 0 : i32
    return %arg0, %c0_i32 : i32, i32
  }
  func.func @transform_1(%arg0: i32, %arg1: i32) -> (i32, i32) {
    %c0_i32 = arith.constant 0 : i32
    %c0_i32_0 = arith.constant 0 : i32
    return %arg0, %c0_i32 : i32, i32
  }
  func.func @transform_2(%arg0: i32, %arg1: i32) -> (i32, i32) {
    %c0_i32 = arith.constant 0 : i32
    %c0_i32_0 = arith.constant 0 : i32
    %c0_i32_1 = arith.constant 0 : i32
    return %c0_i32, %c0_i32_0 : i32, i32
  }
  func.func @transform_3(%arg0: i32, %arg1: i32) -> (i32, i32) {
    %c0_i32 = arith.constant 0 : i32
    %c0_i32_0 = arith.constant 0 : i32
    %c0_i32_1 = arith.constant 0 : i32
    return %c0_i32, %c0_i32_0 : i32, i32
  }
  func.func @transform_4(%arg0: i32, %arg1: i32) -> (i32, i32, i32) {
    %c0_i32 = arith.constant 0 : i32
    %c0_i32_0 = arith.constant 0 : i32
    %c0_i32_1 = arith.constant 0 : i32
    return %arg1, %c0_i32, %c0_i32_0 : i32, i32, i32
  }
  func.func @transform_5(%arg0: i32, %arg1: i32) -> (i32, i32, i32) {
    %c0_i32 = arith.constant 0 : i32
    %c0_i32_0 = arith.constant 0 : i32
    %c0_i32_1 = arith.constant 0 : i32
    return %arg1, %c0_i32, %c0_i32_0 : i32, i32, i32
  }
  func.func @transform_6(%arg0: i32, %arg1: i32) -> (i32, i32, i32) {
    %c0_i32 = arith.constant 0 : i32
    %c0_i32_0 = arith.constant 0 : i32
    %c0_i32_1 = arith.constant 0 : i32
    return %arg1, %c0_i32, %c0_i32_0 : i32, i32, i32
  }
  func.func @transform_7(%arg0: i32, %arg1: i32) -> (i32, i32, i32) {
    %c0_i32 = arith.constant 0 : i32
    %c0_i32_0 = arith.constant 0 : i32
    %c0_i32_1 = arith.constant 0 : i32
    return %arg1, %c0_i32, %c0_i32_0 : i32, i32, i32
  }
  func.func @transform_8(%arg0: i32, %arg1: i32) -> (i32, i32, i32) {
    %c0_i32 = arith.constant 0 : i32
    %c0_i32_0 = arith.constant 0 : i32
    %c0_i32_1 = arith.constant 0 : i32
    return %arg1, %c0_i32, %c0_i32_0 : i32, i32, i32
  }
  func.func @transform_9(%arg0: i32, %arg1: i32) -> (i32, i32, i32) {
    %c0_i32 = arith.constant 0 : i32
    %c0_i32_0 = arith.constant 0 : i32
    %c0_i32_1 = arith.constant 0 : i32
    return %arg1, %c0_i32, %c0_i32_0 : i32, i32, i32
  }
  func.func @transform_10(%arg0: i32, %arg1: i32) -> (i32, i32) {
    %c0_i32 = arith.constant 0 : i32
    %c0_i32_0 = arith.constant 0 : i32
    %c0_i32_1 = arith.constant 0 : i32
    return %c0_i32, %c0_i32_0 : i32, i32
  }
  func.func @transform_11(%arg0: i32, %arg1: i32) -> (i32, i32) {
    %c0_i32 = arith.constant 0 : i32
    %c0_i32_0 = arith.constant 0 : i32
    %c0_i32_1 = arith.constant 0 : i32
    return %c0_i32, %c0_i32_0 : i32, i32
  }
  func.func @transform_12(%arg0: i32, %arg1: i32) -> (i32, i32) {
    %c0_i32 = arith.constant 0 : i32
    %c0_i32_0 = arith.constant 0 : i32
    return %arg0, %c0_i32 : i32, i32
  }
}

</mosaic_0001>

<llo_original>
// kernel: tile.18
$region0: #{tile.18}
  #allocation0 [shape = 's32[1]{0}', space=sflag, size = 0x4, scoped, tag = 'scoped memory for tile.18']
  %s0 = inlined_call_operand.vmem [shape: f32[4], index: 0, kind: input, shape index: {}]
  %s1 = inlined_call_operand.vmem [shape: f32[2,4], index: 1, kind: output, shape index: {}]
  // Predicated region
  $region2: #{tile.18} parent=0 // pred_check
    _
  $region3: #{tile.18} parent=0 // pred_check_branch
    %3 = sbr.rel (0) target = $region5
  $region4: #{tile.18} parent=0 // pred_region
    _
  $region5: #{tile.18} parent=0 // pred_fallthru
    _
  %v4 = vld [vmem:[%s0] ss:$0 sm:$0xff]
  %5 = vst [vmem:[%s1] sm:$0x3] %v4

// kernel: tile.0
$region0: #{tile.0}
  %s0 = inlined_call_operand.vmem [shape: f32[2,4], index: 0, kind: input, shape index: {}]
  %s1 = inlined_call_operand.vmem [shape: f32[8,1], index: 1, kind: output, shape index: {}]
  $region1: #{tile.0} parent=0
    #allocation0 [shape = 'u8[4096]{0}', space=vmem, size = 0x1000, scoped, tag = 'scoped mem for input reshape']
    %s3 = sshllo.u32 0, 2
    %v4 = vld [vmem:[%s0] sm:%s3]
    %5 = vst [vmem:[#allocation0] sm:%s3] %v4
    %v6 = vld [vmem:[#allocation0] sm:$0x3]
    %vm7 = vcmask 7168
    %8 = vst.msk [vmem:[%s1] ss:$4 sm:$0x3] %vm7, %v6
    %v9 = vld [vmem:[#allocation0] sm:$0x3]
    %10 = vrot.lane.b32.xlu0 %v9, 127
    %v11 = vpop.permute.xlu0 %10
    %vm12 = vcmask 7168
    %s13 = scalar_lea.vmem %s1, 1
    %14 = vst.msk [vmem:[%s13] ss:$4 sm:$0x3] %vm12, %v11
    %v15 = vld [vmem:[#allocation0] sm:$0x3]
    %16 = vrot.lane.b32.xlu0 %v15, 126
    %v17 = vpop.permute.xlu0 %16
    %vm18 = vcmask 7168
    %s19 = scalar_lea.vmem %s1, 2
    %20 = vst.msk [vmem:[%s19] ss:$4 sm:$0x3] %vm18, %v17
    %v21 = vld [vmem:[#allocation0] sm:$0x3]
    %22 = vrot.lane.b32.xlu0 %v21, 125
    %v23 = vpop.permute.xlu0 %22
    %vm24 = vcmask 7168
    %s25 = scalar_lea.vmem %s1, 3
    %26 = vst.msk [vmem:[%s25] ss:$4 sm:$0x3] %vm24, %v23

// kernel: lino_forward.1
$region0: #{lino_forward.1}
  #allocation0 [shape = 'u32[]', space=smem, size = 0x4, offset = 0x4, fixed_abs, tag = 'smem constant byte address 0x4 - core index']
  #allocation1 [shape = 'u32[144,128]{1,0:T(1,128)}', space=vmem, size = 0x12000, scoped, tag = 'internal scratch']
  #allocation2 [shape = 'f32[8,32]{1,0:T(8,128)}', space=vmem, size = 0x1000, scoped, tag = 'scratch operand']
  #allocation3 [shape = 'f32[8,40]{1,0:T(8,128)}', space=vmem, size = 0x1000, scoped, tag = 'scratch operand']
  #allocation4 [shape = 'f32[8,1]{1,0:T(8,128)}', space=vmem, size = 0x1000, scoped, tag = 'scratch operand']
  #allocation5 [shape = 'f32[8,1]{1,0:T(8,128)}', space=vmem, size = 0x1000, scoped, tag = 'scratch operand']
  %s0 = inlined_call_operand.vmem [shape: f32[8,40], index: 0, kind: input, shape index: {}]
  %s1 = inlined_call_operand.vmem [shape: f32[8,27], index: 1, kind: input, shape index: {}]
  %s2 = inlined_call_operand.vmem [shape: bf16[16,32], index: 2, kind: input, shape index: {}]
  %s3 = inlined_call_operand.vmem [shape: f32[1,32], index: 3, kind: input, shape index: {}]
  %s4 = inlined_call_operand.vmem [shape: bf16[2,32,32], index: 4, kind: input, shape index: {}]
  %s5 = inlined_call_operand.vmem [shape: f32[2,1,32], index: 5, kind: input, shape index: {}]
  %s6 = inlined_call_operand.vmem [shape: bf16[2,32,64], index: 6, kind: input, shape index: {}]
  %s7 = inlined_call_operand.vmem [shape: f32[2,1,64], index: 7, kind: input, shape index: {}]
  %s8 = inlined_call_operand.vmem [shape: bf16[2,64,32], index: 8, kind: input, shape index: {}]
  %s9 = inlined_call_operand.vmem [shape: f32[2,1,32], index: 9, kind: input, shape index: {}]
  %s10 = inlined_call_operand.vmem [shape: bf16[32,8], index: 10, kind: input, shape index: {}]
  %s11 = inlined_call_operand.vmem [shape: f32[1,8], index: 11, kind: input, shape index: {}]
  %s12 = inlined_call_operand.hbm [shape: f32[8,8], index: 12, kind: output, shape index: {}]
  %s13 = sld [smem:[#allocation0]]
  $region89: #{lino_forward.1} parent=0
    _
  %s15 = ssub.s32 1, %s13
  %s16 = scalar_select 0, %s15, %s13
  $region1: #{lino_forward.1} parent=0
    #allocation6 [shape = 'u8[4096]{0}', space=vmem, size = 0x1000, scoped, tag = 'output window, operand 0, single buffered']
    #allocation7 [shape = 's32[2]{0}', space=sflag, size = 0x8, scoped, tag = 'scoped memory for lino_forward.1']
    %17 = vsyncpa [#allocation7], 0
    loop: start=0, step=1, limit=4
    $region2: #{lino_forward.1} parent=1 // loop_pre_header
      _
    $region3: #{lino_forward.1} parent=1 // loop_header
      %s19 = sphi 0, %s23
      %p20 = scmp.ge.s32.totalorder %s19, 4
      %s26 = sphi 0, %s38
      %s27 = sphi 0, %s34
      %s28 = sphi 0, %s26
      %s29 = sphi 0, %s27
      %s30 = sphi 0, %s28
      %s31 = sphi 0, %s29
      %s41 = sphi 0, %s43
      %s44 = sphi 0, %s41
      %s45 = sphi 0, %s44
      %s61 = sphi 0, %s45
      %s67 = sphi 0, %s69
      %s70 = sphi 0, %s67
      %s71 = sphi 0, %s70
      %s87 = sphi 0, %s71
      %s91 = sphi 0, %s91
      %s93 = sphi 0, %s91
      %s94 = sphi 0, %s93
      %s108 = sphi 0, %s94
      %s112 = sphi 0, %s112
      %s114 = sphi 0, %s112
      %s115 = sphi 0, %s114
      %s129 = sphi 0, %s115
      %s135 = sphi 0, %s137
      %s138 = sphi 0, %s135
      %s139 = sphi 0, %s138
      %s155 = sphi 0, %s139
      %s161 = sphi 0, %s163
      %s164 = sphi 0, %s161
      %s165 = sphi 0, %s164
      %s181 = sphi 0, %s165
      %s187 = sphi 0, %s189
      %s190 = sphi 0, %s187
      %s191 = sphi 0, %s190
      %s207 = sphi 0, %s191
      %s213 = sphi 0, %s215
      %s216 = sphi 0, %s213
      %s217 = sphi 0, %s216
      %s233 = sphi 0, %s217
      %s239 = sphi 0, %s241
      %s242 = sphi 0, %s239
      %s243 = sphi 0, %s242
      %s259 = sphi 0, %s243
      %s265 = sphi 0, %s267
      %s268 = sphi 0, %s265
      %s269 = sphi 0, %s268
      %s285 = sphi 0, %s269
      %s289 = sphi 0, %s289
      %s291 = sphi 0, %s289
      %s292 = sphi 0, %s291
      %s306 = sphi 0, %s292
      %s310 = sphi 0, %s310
      %s312 = sphi 0, %s310
      %s313 = sphi 0, %s312
      %s327 = sphi 0, %s313
      %s333 = sphi 0, %s335
      %s336 = sphi 0, %s333
      %s337 = sphi 0, %s336
      %s353 = sphi 0, %s337
    $region4: #{lino_forward.1} parent=1 // loop_header_branch
      %22 = sbr.rel (%p20) target = $region8
    $region5: #{lino_forward.1} parent=1 // loop_body
      %s24 = ssub.s32 %s19, 1
      %s25 = ssub.s32 %s19, 2
      %s32 = sadd.s32 1, %s27
      %p33 = scmp.ge.s32.totalorder %s32, 2
      %s34 = scalar_select %p33, 0, %s32
      %s35 = sadd.s32 1, %s26
      %s36 = scalar_select %p33, %s35, %s26
      %p37 = scmp.ge.s32.totalorder %s36, 1
      %s38 = scalar_select %p37, 0, %s36
      %s39 = ssub.s32 %s26, %s38
      %p40 = scmp.eq.s32.totalorder %s39, 0
      %s42 = sadd.s32 %s41, 1
      %s43 = scalar_select %p40, %s41, %s42
      %p46 = pneg %p40
      %p47 = scmp.eq.s32.totalorder %s19, 1
      %p48 = por %p46, %p47
      %p49 = scmp.ne.s32.totalorder %s41, %s44
      %p50 = scmp.eq.s32.totalorder %s19, 0
      %p51 = por %p49, %p50
      %p52 = scmp.ne.s32.totalorder %s41, %s44
      %p53 = scmp.eq.s32.totalorder %s24, 1
      %p54 = por %p52, %p53
      %p55 = scmp.ne.s32.totalorder %s44, %s45
      %p56 = scmp.eq.s32.totalorder %s24, 0
      %p57 = por %p55, %p56
      %p58 = scmp.ne.s32.totalorder %s44, %s45
      %p59 = scmp.eq.s32.totalorder %s25, 1
      %p60 = por %p58, %p59
      %p62 = scmp.ne.s32.totalorder %s45, %s61
      %p63 = scmp.eq.s32.totalorder %s25, 0
      %p64 = por %p62, %p63
      %s65 = ssub.s32 %s26, %s38
      %p66 = scmp.eq.s32.totalorder %s65, 0
      %s68 = sadd.s32 %s67, 1
      %s69 = scalar_select %p66, %s67, %s68
      %p72 = pneg %p66
      %p73 = scmp.eq.s32.totalorder %s19, 1
      %p74 = por %p72, %p73
      %p75 = scmp.ne.s32.totalorder %s67, %s70
      %p76 = scmp.eq.s32.totalorder %s19, 0
      %p77 = por %p75, %p76
      %p78 = scmp.ne.s32.totalorder %s67, %s70
      %p79 = scmp.eq.s32.totalorder %s24, 1
      %p80 = por %p78, %p79
      %p81 = scmp.ne.s32.totalorder %s70, %s71
      %p82 = scmp.eq.s32.totalorder %s24, 0
      %p83 = por %p81, %p82
      %p84 = scmp.ne.s32.totalorder %s70, %s71
      %p85 = scmp.eq.s32.totalorder %s25, 1
      %p86 = por %p84, %p85
      %p88 = scmp.ne.s32.totalorder %s71, %s87
      %p89 = scmp.eq.s32.totalorder %s25, 0
      %p90 = por %p88, %p89
      %s92 = sadd.s32 %s91, 1
      %p95 = scmp.eq.s32.totalorder %s19, 1
      %p96 = scmp.ne.s32.totalorder %s91, %s93
      %p97 = scmp.eq.s32.totalorder %s19, 0
      %p98 = por %p96, %p97
      %p99 = scmp.ne.s32.totalorder %s91, %s93
      %p100 = scmp.eq.s32.totalorder %s24, 1
      %p101 = por %p99, %p100
      %p102 = scmp.ne.s32.totalorder %s93, %s94
      %p103 = scmp.eq.s32.totalorder %s24, 0
      %p104 = por %p102, %p103
      %p105 = scmp.ne.s32.totalorder %s93, %s94
      %p106 = scmp.eq.s32.totalorder %s25, 1
      %p107 = por %p105, %p106
      %p109 = scmp.ne.s32.totalorder %s94, %s108
      %p110 = scmp.eq.s32.totalorder %s25, 0
      %p111 = por %p109, %p110
      %s113 = sadd.s32 %s112, 1
      %p116 = scmp.eq.s32.totalorder %s19, 1
      %p117 = scmp.ne.s32.totalorder %s112, %s114
      %p118 = scmp.eq.s32.totalorder %s19, 0
      %p119 = por %p117, %p118
      %p120 = scmp.ne.s32.totalorder %s112, %s114
      %p121 = scmp.eq.s32.totalorder %s24, 1
      %p122 = por %p120, %p121
      %p123 = scmp.ne.s32.totalorder %s114, %s115
      %p124 = scmp.eq.s32.totalorder %s24, 0
      %p125 = por %p123, %p124
      %p126 = scmp.ne.s32.totalorder %s114, %s115
      %p127 = scmp.eq.s32.totalorder %s25, 1
      %p128 = por %p126, %p127
      %p130 = scmp.ne.s32.totalorder %s115, %s129
      %p131 = scmp.eq.s32.totalorder %s25, 0
      %p132 = por %p130, %p131
      %s133 = ssub.s32 %s27, %s34
      %p134 = scmp.eq.s32.totalorder %s133, 0
      %s136 = sadd.s32 %s135, 1
      %s137 = scalar_select %p134, %s135, %s136
      %p140 = pneg %p134
      %p141 = scmp.eq.s32.totalorder %s19, 1
      %p142 = por %p140, %p141
      %p143 = scmp.ne.s32.totalorder %s135, %s138
      %p144 = scmp.eq.s32.totalorder %s19, 0
      %p145 = por %p143, %p144
      %p146 = scmp.ne.s32.totalorder %s135, %s138
      %p147 = scmp.eq.s32.totalorder %s24, 1
      %p148 = por %p146, %p147
      %p149 = scmp.ne.s32.totalorder %s138, %s139
      %p150 = scmp.eq.s32.totalorder %s24, 0
      %p151 = por %p149, %p150
      %p152 = scmp.ne.s32.totalorder %s138, %s139
      %p153 = scmp.eq.s32.totalorder %s25, 1
      %p154 = por %p152, %p153
      %p156 = scmp.ne.s32.totalorder %s139, %s155
      %p157 = scmp.eq.s32.totalorder %s25, 0
      %p158 = por %p156, %p157
      %s159 = ssub.s32 %s27, %s34
      %p160 = scmp.eq.s32.totalorder %s159, 0
      %s162 = sadd.s32 %s161, 1
      %s163 = scalar_select %p160, %s161, %s162
      %p166 = pneg %p160
      %p167 = scmp.eq.s32.totalorder %s19, 1
      %p168 = por %p166, %p167
      %p169 = scmp.ne.s32.totalorder %s161, %s164
      %p170 = scmp.eq.s32.totalorder %s19, 0
      %p171 = por %p169, %p170
      %p172 = scmp.ne.s32.totalorder %s161, %s164
      %p173 = scmp.eq.s32.totalorder %s24, 1
      %p174 = por %p172, %p173
      %p175 = scmp.ne.s32.totalorder %s164, %s165
      %p176 = scmp.eq.s32.totalorder %s24, 0
      %p177 = por %p175, %p176
      %p178 = scmp.ne.s32.totalorder %s164, %s165
      %p179 = scmp.eq.s32.totalorder %s25, 1
      %p180 = por %p178, %p179
      %p182 = scmp.ne.s32.totalorder %s165, %s181
      %p183 = scmp.eq.s32.totalorder %s25, 0
      %p184 = por %p182, %p183
      %s185 = ssub.s32 %s27, %s34
      %p186 = scmp.eq.s32.totalorder %s185, 0
      %s188 = sadd.s32 %s187, 1
      %s189 = scalar_select %p186, %s187, %s188
      %p192 = pneg %p186
      %p193 = scmp.eq.s32.totalorder %s19, 1
      %p194 = por %p192, %p193
      %p195 = scmp.ne.s32.totalorder %s187, %s190
      %p196 = scmp.eq.s32.totalorder %s19, 0
      %p197 = por %p195, %p196
      %p198 = scmp.ne.s32.totalorder %s187, %s190
      %p199 = scmp.eq.s32.totalorder %s24, 1
      %p200 = por %p198, %p199
      %p201 = scmp.ne.s32.totalorder %s190, %s191
      %p202 = scmp.eq.s32.totalorder %s24, 0
      %p203 = por %p201, %p202
      %p204 = scmp.ne.s32.totalorder %s190, %s191
      %p205 = scmp.eq.s32.totalorder %s25, 1
      %p206 = por %p204, %p205
      %p208 = scmp.ne.s32.totalorder %s191, %s207
      %p209 = scmp.eq.s32.totalorder %s25, 0
      %p210 = por %p208, %p209
      %s211 = ssub.s32 %s27, %s34
      %p212 = scmp.eq.s32.totalorder %s211, 0
      %s214 = sadd.s32 %s213, 1
      %s215 = scalar_select %p212, %s213, %s214
      %p218 = pneg %p212
      %p219 = scmp.eq.s32.totalorder %s19, 1
      %p220 = por %p218, %p219
      %p221 = scmp.ne.s32.totalorder %s213, %s216
      %p222 = scmp.eq.s32.totalorder %s19, 0
      %p223 = por %p221, %p222
      %p224 = scmp.ne.s32.totalorder %s213, %s216
      %p225 = scmp.eq.s32.totalorder %s24, 1
      %p226 = por %p224, %p225
      %p227 = scmp.ne.s32.totalorder %s216, %s217
      %p228 = scmp.eq.s32.totalorder %s24, 0
      %p229 = por %p227, %p228
      %p230 = scmp.ne.s32.totalorder %s216, %s217
      %p231 = scmp.eq.s32.totalorder %s25, 1
      %p232 = por %p230, %p231
      %p234 = scmp.ne.s32.totalorder %s217, %s233
      %p235 = scmp.eq.s32.totalorder %s25, 0
      %p236 = por %p234, %p235
      %s237 = ssub.s32 %s27, %s34
      %p238 = scmp.eq.s32.totalorder %s237, 0
      %s240 = sadd.s32 %s239, 1
      %s241 = scalar_select %p238, %s239, %s240
      %p244 = pneg %p238
      %p245 = scmp.eq.s32.totalorder %s19, 1
      %p246 = por %p244, %p245
      %p247 = scmp.ne.s32.totalorder %s239, %s242
      %p248 = scmp.eq.s32.totalorder %s19, 0
      %p249 = por %p247, %p248
      %p250 = scmp.ne.s32.totalorder %s239, %s242
      %p251 = scmp.eq.s32.totalorder %s24, 1
      %p252 = por %p250, %p251
      %p253 = scmp.ne.s32.totalorder %s242, %s243
      %p254 = scmp.eq.s32.totalorder %s24, 0
      %p255 = por %p253, %p254
      %p256 = scmp.ne.s32.totalorder %s242, %s243
      %p257 = scmp.eq.s32.totalorder %s25, 1
      %p258 = por %p256, %p257
      %p260 = scmp.ne.s32.totalorder %s243, %s259
      %p261 = scmp.eq.s32.totalorder %s25, 0
      %p262 = por %p260, %p261
      %s263 = ssub.s32 %s27, %s34
      %p264 = scmp.eq.s32.totalorder %s263, 0
      %s266 = sadd.s32 %s265, 1
      %s267 = scalar_select %p264, %s265, %s266
      %p270 = pneg %p264
      %p271 = scmp.eq.s32.totalorder %s19, 1
      %p272 = por %p270, %p271
      %p273 = scmp.ne.s32.totalorder %s265, %s268
      %p274 = scmp.eq.s32.totalorder %s19, 0
      %p275 = por %p273, %p274
      %p276 = scmp.ne.s32.totalorder %s265, %s268
      %p277 = scmp.eq.s32.totalorder %s24, 1
      %p278 = por %p276, %p277
      %p279 = scmp.ne.s32.totalorder %s268, %s269
      %p280 = scmp.eq.s32.totalorder %s24, 0
      %p281 = por %p279, %p280
      %p282 = scmp.ne.s32.totalorder %s268, %s269
      %p283 = scmp.eq.s32.totalorder %s25, 1
      %p284 = por %p282, %p283
      %p286 = scmp.ne.s32.totalorder %s269, %s285
      %p287 = scmp.eq.s32.totalorder %s25, 0
      %p288 = por %p286, %p287
      %s290 = sadd.s32 %s289, 1
      %p293 = scmp.eq.s32.totalorder %s19, 1
      %p294 = scmp.ne.s32.totalorder %s289, %s291
      %p295 = scmp.eq.s32.totalorder %s19, 0
      %p296 = por %p294, %p295
      %p297 = scmp.ne.s32.totalorder %s289, %s291
      %p298 = scmp.eq.s32.totalorder %s24, 1
      %p299 = por %p297, %p298
      %p300 = scmp.ne.s32.totalorder %s291, %s292
      %p301 = scmp.eq.s32.totalorder %s24, 0
      %p302 = por %p300, %p301
      %p303 = scmp.ne.s32.totalorder %s291, %s292
      %p304 = scmp.eq.s32.totalorder %s25, 1
      %p305 = por %p303, %p304
      %p307 = scmp.ne.s32.totalorder %s292, %s306
      %p308 = scmp.eq.s32.totalorder %s25, 0
      %p309 = por %p307, %p308
      %s311 = sadd.s32 %s310, 1
      %p314 = scmp.eq.s32.totalorder %s19, 1
      %p315 = scmp.ne.s32.totalorder %s310, %s312
      %p316 = scmp.eq.s32.totalorder %s19, 0
      %p317 = por %p315, %p316
      %p318 = scmp.ne.s32.totalorder %s310, %s312
      %p319 = scmp.eq.s32.totalorder %s24, 1
      %p320 = por %p318, %p319
      %p321 = scmp.ne.s32.totalorder %s312, %s313
      %p322 = scmp.eq.s32.totalorder %s24, 0
      %p323 = por %p321, %p322
      %p324 = scmp.ne.s32.totalorder %s312, %s313
      %p325 = scmp.eq.s32.totalorder %s25, 1
      %p326 = por %p324, %p325
      %p328 = scmp.ne.s32.totalorder %s313, %s327
      %p329 = scmp.eq.s32.totalorder %s25, 0
      %p330 = por %p328, %p329
      %s331 = ssub.s32 %s26, %s38
      %p332 = scmp.eq.s32.totalorder %s331, 0
      %s334 = sadd.s32 %s333, 1
      %s335 = scalar_select %p332, %s333, %s334
      %p338 = pneg %p332
      %p339 = scmp.eq.s32.totalorder %s19, 1
      %p340 = por %p338, %p339
      %p341 = scmp.ne.s32.totalorder %s333, %s336
      %p342 = scmp.eq.s32.totalorder %s19, 0
      %p343 = por %p341, %p342
      %p344 = scmp.ne.s32.totalorder %s333, %s336
      %p345 = scmp.eq.s32.totalorder %s24, 1
      %p346 = por %p344, %p345
      %p347 = scmp.ne.s32.totalorder %s336, %s337
      %p348 = scmp.eq.s32.totalorder %s24, 0
      %p349 = por %p347, %p348
      %p350 = scmp.ne.s32.totalorder %s336, %s337
      %p351 = scmp.eq.s32.totalorder %s25, 1
      %p352 = por %p350, %p351
      %p354 = scmp.ne.s32.totalorder %s337, %s353
      %p355 = scmp.eq.s32.totalorder %s25, 0
      %p356 = por %p354, %p355
      %p357 = scmp.le.s32.totalorder 1, %s19
      %p358 = scmp.lt.s32.totalorder %s19, 3
      %p359 = pnand %p357, %p358
      %p360 = pneg %p359
      // Predicated region
      $region9: #{lino_forward.1} parent=5 // pred_check
        _
      $region10: #{lino_forward.1} parent=5 // pred_check_branch
        %362 = sbr.rel (%p359) target = $region12
      $region11: #{lino_forward.1} parent=5 // pred_region
        %s363 = ssub.s32 %s19, 1
        // Predicated region
        $region13: #{lino_forward.1} parent=11 // pred_check
          %p364 = pneg %p57
        $region14: #{lino_forward.1} parent=11 // pred_check_branch
          %366 = sbr.rel (%p364) target = $region16
        $region15: #{lino_forward.1} parent=11 // pred_region
          %p367 = scmp.lt.s32.totalorder %s28, 0
          %s368 = scalar_select %p367, %s28, 0
          %s369 = smul.addr %s368, 8
          %s370 = scalar_lea.vmem %s0, %s369
        $region16: #{lino_forward.1} parent=11 // pred_fallthru
          _
        // Predicated region
        $region17: #{lino_forward.1} parent=11 // pred_check
          %p371 = pneg %p83
        $region18: #{lino_forward.1} parent=11 // pred_check_branch
          %373 = sbr.rel (%p371) target = $region20
        $region19: #{lino_forward.1} parent=11 // pred_region
          %p374 = scmp.lt.s32.totalorder %s28, 0
          %s375 = scalar_select %p374, %s28, 0
          %s376 = smul.addr %s375, 8
          %s377 = scalar_lea.vmem %s1, %s376
        $region20: #{lino_forward.1} parent=11 // pred_fallthru
          _
        // Predicated region
        $region21: #{lino_forward.1} parent=11 // pred_check
          %p378 = pneg %p104
        $region22: #{lino_forward.1} parent=11 // pred_check_branch
          %380 = sbr.rel (%p378) target = $region24
        $region23: #{lino_forward.1} parent=11 // pred_region
          _
        $region24: #{lino_forward.1} parent=11 // pred_fallthru
          _
        // Predicated region
        $region25: #{lino_forward.1} parent=11 // pred_check
          %p381 = pneg %p125
        $region26: #{lino_forward.1} parent=11 // pred_check_branch
          %383 = sbr.rel (%p381) target = $region28
        $region27: #{lino_forward.1} parent=11 // pred_region
          _
        $region28: #{lino_forward.1} parent=11 // pred_fallthru
          _
        // Predicated region
        $region29: #{lino_forward.1} parent=11 // pred_check
          %p384 = pneg %p302
        $region30: #{lino_forward.1} parent=11 // pred_check_branch
          %386 = sbr.rel (%p384) target = $region32
        $region31: #{lino_forward.1} parent=11 // pred_region
          _
        $region32: #{lino_forward.1} parent=11 // pred_fallthru
          _
        // Predicated region
        $region33: #{lino_forward.1} parent=11 // pred_check
          %p387 = pneg %p323
        $region34: #{lino_forward.1} parent=11 // pred_check_branch
          %389 = sbr.rel (%p387) target = $region36
        $region35: #{lino_forward.1} parent=11 // pred_region
          _
        $region36: #{lino_forward.1} parent=11 // pred_fallthru
          _
      $region12: #{lino_forward.1} parent=5 // pred_fallthru
        _
      %p390 = scmp.lt.s32.totalorder %s19, 2
      // Predicated region
      $region37: #{lino_forward.1} parent=5 // pred_check
        %p391 = pneg %p390
      $region38: #{lino_forward.1} parent=5 // pred_check_branch
        %393 = sbr.rel (%p391) target = $region40
      $region39: #{lino_forward.1} parent=5 // pred_region
        // Predicated region
        $region41: #{lino_forward.1} parent=39 // pred_check
          %p394 = pneg %p145
        $region42: #{lino_forward.1} parent=39 // pred_check_branch
          %396 = sbr.rel (%p394) target = $region44
        $region43: #{lino_forward.1} parent=39 // pred_region
          %p397 = scmp.lt.s32.totalorder %s27, 1
          %s398 = scalar_select %p397, %s27, 1
          %s399 = smul.addr %s398, 4
          %s400 = smul.addr %s399, 4
          %s401 = scalar_lea.vmem %s4, %s400
        $region44: #{lino_forward.1} parent=39 // pred_fallthru
          _
        // Predicated region
        $region45: #{lino_forward.1} parent=39 // pred_check
          %p402 = pneg %p171
        $region46: #{lino_forward.1} parent=39 // pred_check_branch
          %404 = sbr.rel (%p402) target = $region48
        $region47: #{lino_forward.1} parent=39 // pred_region
          %p405 = scmp.lt.s32.totalorder %s27, 1
          %s406 = scalar_select %p405, %s27, 1
          %s407 = scalar_lea.vmem %s5, %s406
        $region48: #{lino_forward.1} parent=39 // pred_fallthru
          _
        // Predicated region
        $region49: #{lino_forward.1} parent=39 // pred_check
          %p408 = pneg %p197
        $region50: #{lino_forward.1} parent=39 // pred_check_branch
          %410 = sbr.rel (%p408) target = $region52
        $region51: #{lino_forward.1} parent=39 // pred_region
          %p411 = scmp.lt.s32.totalorder %s27, 1
          %s412 = scalar_select %p411, %s27, 1
          %s413 = smul.addr %s412, 4
          %s414 = smul.addr %s413, 4
          %s415 = scalar_lea.vmem %s6, %s414
        $region52: #{lino_forward.1} parent=39 // pred_fallthru
          _
        // Predicated region
        $region53: #{lino_forward.1} parent=39 // pred_check
          %p416 = pneg %p223
        $region54: #{lino_forward.1} parent=39 // pred_check_branch
          %418 = sbr.rel (%p416) target = $region56
        $region55: #{lino_forward.1} parent=39 // pred_region
          %p419 = scmp.lt.s32.totalorder %s27, 1
          %s420 = scalar_select %p419, %s27, 1
          %s421 = scalar_lea.vmem %s7, %s420
        $region56: #{lino_forward.1} parent=39 // pred_fallthru
          _
        // Predicated region
        $region57: #{lino_forward.1} parent=39 // pred_check
          %p422 = pneg %p249
        $region58: #{lino_forward.1} parent=39 // pred_check_branch
          %424 = sbr.rel (%p422) target = $region60
        $region59: #{lino_forward.1} parent=39 // pred_region
          %p425 = scmp.lt.s32.totalorder %s27, 1
          %s426 = scalar_select %p425, %s27, 1
          %s427 = smul.addr %s426, 8
          %s428 = smul.addr %s427, 4
          %s429 = scalar_lea.vmem %s8, %s428
        $region60: #{lino_forward.1} parent=39 // pred_fallthru
          _
        // Predicated region
        $region61: #{lino_forward.1} parent=39 // pred_check
          %p430 = pneg %p275
        $region62: #{lino_forward.1} parent=39 // pred_check_branch
          %432 = sbr.rel (%p430) target = $region64
        $region63: #{lino_forward.1} parent=39 // pred_region
          %p433 = scmp.lt.s32.totalorder %s27, 1
          %s434 = scalar_select %p433, %s27, 1
          %s435 = scalar_lea.vmem %s9, %s434
        $region64: #{lino_forward.1} parent=39 // pred_fallthru
          _
      $region40: #{lino_forward.1} parent=5 // pred_fallthru
        _
      %p436 = scmp.le.s32.totalorder 1, %s19
      %p437 = scmp.lt.s32.totalorder %s19, 3
      %p438 = pnand %p436, %p437
      %p439 = pneg %p438
      // Predicated region
      $region65: #{lino_forward.1} parent=5 // pred_check
        _
      $region66: #{lino_forward.1} parent=5 // pred_check_branch
        %441 = sbr.rel (%p438) target = $region68
      $region67: #{lino_forward.1} parent=5 // pred_region
        %s442 = ssub.s32 %s19, 1
        %p443 = scmp.lt.s32.totalorder %s28, 0
        %s444 = scalar_select %p443, %s28, 0
        %s445 = smul.addr %s444, 8
        %s446 = scalar_lea.vmem %s0, %s445
        %p447 = pneg %p57
        %p448 = pneg %p54
        %p449 = scmp.lt.s32.totalorder %s28, 0
        %s450 = scalar_select %p449, %s28, 0
        %s451 = smul.addr %s450, 8
        %s452 = scalar_lea.vmem %s1, %s451
        %p453 = pneg %p83
        %p454 = pneg %p80
        %p455 = pneg %p104
        %p456 = pneg %p101
        %p457 = pneg %p125
        %p458 = pneg %p122
        %p459 = scmp.lt.s32.totalorder %s29, 1
        %s460 = scalar_select %p459, %s29, 1
        %s461 = smul.addr %s460, 4
        %s462 = smul.addr %s461, 4
        %s463 = scalar_lea.vmem %s4, %s462
        %p464 = pneg %p151
        %p465 = pneg %p148
        %p466 = scmp.lt.s32.totalorder %s29, 1
        %s467 = scalar_select %p466, %s29, 1
        %s468 = scalar_lea.vmem %s5, %s467
        %p469 = pneg %p177
        %p470 = pneg %p174
        %p471 = scmp.lt.s32.totalorder %s29, 1
        %s472 = scalar_select %p471, %s29, 1
        %s473 = smul.addr %s472, 4
        %s474 = smul.addr %s473, 4
        %s475 = scalar_lea.vmem %s6, %s474
        %p476 = pneg %p203
        %p477 = pneg %p200
        %p478 = scmp.lt.s32.totalorder %s29, 1
        %s479 = scalar_select %p478, %s29, 1
        %s480 = scalar_lea.vmem %s7, %s479
        %p481 = pneg %p229
        %p482 = pneg %p226
        %p483 = scmp.lt.s32.totalorder %s29, 1
        %s484 = scalar_select %p483, %s29, 1
        %s485 = smul.addr %s484, 8
        %s486 = smul.addr %s485, 4
        %s487 = scalar_lea.vmem %s8, %s486
        %p488 = pneg %p255
        %p489 = pneg %p252
        %p490 = scmp.lt.s32.totalorder %s29, 1
        %s491 = scalar_select %p490, %s29, 1
        %s492 = scalar_lea.vmem %s9, %s491
        %p493 = pneg %p281
        %p494 = pneg %p278
        %p495 = pneg %p302
        %p496 = pneg %p299
        %p497 = pneg %p323
        %p498 = pneg %p320
        %p499 = pneg %p349
        %p500 = pneg %p346
        %p501 = scmp.lt.s32.totalorder %s28, 0
        %s502 = scalar_select %p501, %s28, 0
        %s503 = smul.addr %s502, 8
        %s504 = scalar_lea.vmem %s0, %s503
        %p505 = scmp.lt.s32.totalorder %s28, 0
        %s506 = scalar_select %p505, %s28, 0
        %s507 = smul.addr %s506, 8
        %s508 = scalar_lea.vmem %s1, %s507
        %p509 = scmp.lt.s32.totalorder %s29, 1
        %s510 = scalar_select %p509, %s29, 1
        %s511 = smul.addr %s510, 4
        %s512 = smul.addr %s511, 4
        %s513 = scalar_lea.vmem %s4, %s512
        %p514 = scmp.lt.s32.totalorder %s29, 1
        %s515 = scalar_select %p514, %s29, 1
        %s516 = scalar_lea.vmem %s5, %s515
        %p517 = scmp.lt.s32.totalorder %s29, 1
        %s518 = scalar_select %p517, %s29, 1
        %s519 = smul.addr %s518, 4
        %s520 = smul.addr %s519, 4
        %s521 = scalar_lea.vmem %s6, %s520
        %p522 = scmp.lt.s32.totalorder %s29, 1
        %s523 = scalar_select %p522, %s29, 1
        %s524 = scalar_lea.vmem %s7, %s523
        %p525 = scmp.lt.s32.totalorder %s29, 1
        %s526 = scalar_select %p525, %s29, 1
        %s527 = smul.addr %s526, 8
        %s528 = smul.addr %s527, 4
        %s529 = scalar_lea.vmem %s8, %s528
        %p530 = scmp.lt.s32.totalorder %s29, 1
        %s531 = scalar_select %p530, %s29, 1
        %s532 = scalar_lea.vmem %s9, %s531
        %p534 = scmp.eq.s32.totalorder %s29, 0
        // Predicated region
        $region69: #{lino_forward.1} parent=67 // pred_check
          %p535 = pneg %p534
        $region70: #{lino_forward.1} parent=67 // pred_check_branch
          %537 = sbr.rel (%p535) target = $region72
        $region71: #{lino_forward.1} parent=67 // pred_region
          %v538 = vld [vmem:[%s504] sm:$0xff]
          %v539 = vld [vmem:[%s508] sm:$0xff]
          %vm540 = vcmask 326656
          %v541 = vsel %vm540, %v538, 0.0
          %542 = vadd.xlane.f32.xlu0 %v541
          %v543 = vpop.xlane.xlu0 %542
          %v544 = vmul.f32 %v543, 0.0625
          %v545 = vmul.f32 %v538, %v538
          %v546 = vsel %vm540, %v545, 0.0
          %547 = vadd.xlane.f32.xlu0 %v546
          %v548 = vpop.xlane.xlu0 %547
          %v549 = vmul.f32 %v548, 0.0625
          %v550 = vmul.f32 %v544, %v544
          %v551 = vsub.f32 %v549, %v550
          %v552 = vmax.f32 %v551, 0.0
          %v553 = vadd.f32 %v552, 1e-05
          %v554 = vrsqrt.pop %v553
          %v555 = vmul.f32 %v553, %v554
          %v556 = vadd.f32 %v539, 1e-10
          %v557 = vrcp.pop %v556
          %v558 = vmul.f32 %v555, %v557
          %vm559 = vcmask 7168
          %560 = vst.msk [vmem:[#allocation4] sm:$0xff] %vm559, %v558
          %562 = vrot.lane.b32.xlu0 %v558, 1
          %v563 = vpop.permute.xlu0 %562
          %v565 = vmul.f32 %v539, %v563
          %v566 = vsub.f32 %v544, %v565
          %568 = vrot.lane.b32.xlu0 %v566, 127
          %v569 = vpop.permute.xlu0 %568
          %571 = vst.msk [vmem:[#allocation5] sm:$0xff] %vm559, %v569
          %v572 = vlaneseq
          %v573 = vand.u32 %v572, 127
          %vm574 = vcmp.ge.s32.totalorder %v573, 12
          %vm575 = vcmp.lt.s32.totalorder %v573, 28
          %vm576 = vmand %vm574, %vm575
          %v577 = vmul.f32 %v554, %v539
          %v578 = vmul.f32 %v544, %v577
          %580 = vrot.lane.b32.xlu0 %v578, 1
          %v581 = vpop.permute.xlu0 %580
          %v583 = vsub.f32 %v539, %v581
          %585 = vset.pattern.permute.xlu0 0
          %586 = vperm.xlu0 %585, %v577
          %v587 = vpop.permute.xlu0 %586
          %v589 = vmul.f32 %v538, %v587
          %591 = vset.pattern.permute.xlu0 1
          %592 = vperm.xlu0 %591, %v583
          %v593 = vpop.permute.xlu0 %592
          %v595 = vadd.f32 %v589, %v593
          %v596 = vsel %vm576, %v595, 0.0
          %597 = vst.msk [vmem:[#allocation3] sm:$0xff] %vm540, %v596
          %v598 = vld [vmem:[%s508] sm:$0xff]
          %v599 = vld [vmem:[#allocation3] sm:$0xff]
          %601 = vset.pattern.permute.xlu0 2
          %602 = vperm.xlu0 %601, %v598
          %v603 = vpop.permute.xlu0 %602
          %v605 = vmul.f32 %v599, %v603
          %v606 = vadd.f32 %v605, 0.0
          %607 = vset.pattern.permute.xlu0 3
          %608 = vperm.xlu0 %607, %v598
          %v609 = vpop.permute.xlu0 %608
          %v611 = vmul.f32 %v599, %v609
          %613 = vrot.lane.b32.xlu0 %v611, 127
          %v614 = vpop.permute.xlu0 %613
          %v616 = vadd.f32 %v606, %v614
          %617 = vset.pattern.permute.xlu0 4
          %618 = vperm.xlu0 %617, %v598
          %v619 = vpop.permute.xlu0 %618
          %v621 = vmul.f32 %v599, %v619
          %623 = vrot.lane.b32.xlu0 %v621, 126
          %v624 = vpop.permute.xlu0 %623
          %v626 = vadd.f32 %v616, %v624
          %627 = vset.pattern.permute.xlu0 5
          %628 = vperm.xlu0 %627, %v598
          %v629 = vpop.permute.xlu0 %628
          %v631 = vmul.f32 %v599, %v629
          %633 = vrot.lane.b32.xlu0 %v631, 125
          %v634 = vpop.permute.xlu0 %633
          %v636 = vadd.f32 %v626, %v634
          %637 = vset.pattern.permute.xlu0 6
          %638 = vperm.xlu0 %637, %v598
          %v639 = vpop.permute.xlu0 %638
          %v641 = vmul.f32 %v599, %v639
          %643 = vrot.lane.b32.xlu0 %v641, 124
          %v644 = vpop.permute.xlu0 %643
          %v646 = vadd.f32 %v636, %v644
          %647 = vset.pattern.permute.xlu0 7
          %648 = vperm.xlu0 %647, %v598
          %v649 = vpop.permute.xlu0 %648
          %v651 = vmul.f32 %v599, %v649
          %653 = vrot.lane.b32.xlu0 %v651, 123
          %v654 = vpop.permute.xlu0 %653
          %v656 = vadd.f32 %v646, %v654
          %657 = vset.pattern.permute.xlu0 8
          %658 = vperm.xlu0 %657, %v598
          %v659 = vpop.permute.xlu0 %658
          %v661 = vmul.f32 %v599, %v659
          %663 = vrot.lane.b32.xlu0 %v661, 122
          %v664 = vpop.permute.xlu0 %663
          %v666 = vadd.f32 %v656, %v664
          %667 = vset.pattern.permute.xlu0 9
          %668 = vperm.xlu0 %667, %v598
          %v669 = vpop.permute.xlu0 %668
          %v671 = vmul.f32 %v599, %v669
          %673 = vrot.lane.b32.xlu0 %v671, 121
          %v674 = vpop.permute.xlu0 %673
          %v676 = vadd.f32 %v666, %v674
          %677 = vset.pattern.permute.xlu0 10
          %678 = vperm.xlu0 %677, %v598
          %v679 = vpop.permute.xlu0 %678
          %v681 = vmul.f32 %v599, %v679
          %683 = vrot.lane.b32.xlu0 %v681, 120
          %v684 = vpop.permute.xlu0 %683
          %v686 = vadd.f32 %v676, %v684
          %687 = vset.pattern.permute.xlu0 11
          %688 = vperm.xlu0 %687, %v598
          %v689 = vpop.permute.xlu0 %688
          %v691 = vmul.f32 %v599, %v689
          %693 = vrot.lane.b32.xlu0 %v691, 119
          %v694 = vpop.permute.xlu0 %693
          %v696 = vadd.f32 %v686, %v694
          %697 = vset.pattern.permute.xlu0 12
          %698 = vperm.xlu0 %697, %v598
          %v699 = vpop.permute.xlu0 %698
          %v701 = vmul.f32 %v599, %v699
          %703 = vrot.lane.b32.xlu0 %v701, 118
          %v704 = vpop.permute.xlu0 %703
          %v706 = vadd.f32 %v696, %v704
          %707 = vset.pattern.permute.xlu0 13
          %708 = vperm.xlu0 %707, %v598
          %v709 = vpop.permute.xlu0 %708
          %v711 = vmul.f32 %v599, %v709
          %713 = vrot.lane.b32.xlu0 %v711, 117
          %v714 = vpop.permute.xlu0 %713
          %v716 = vadd.f32 %v706, %v714
          %717 = vset.pattern.permute.xlu0 14
          %718 = vperm.xlu0 %717, %v598
          %v719 = vpop.permute.xlu0 %718
          %v721 = vmul.f32 %v599, %v719
          %723 = vrot.lane.b32.xlu0 %v721, 116
          %v724 = vpop.permute.xlu0 %723
          %v726 = vadd.f32 %v716, %v724
          %727 = vset.pattern.permute.xlu0 15
          %728 = vperm.xlu0 %727, %v598
          %v729 = vpop.permute.xlu0 %728
          %v731 = vmul.f32 %v599, %v729
          %733 = vrot.lane.b32.xlu0 %v731, 115
          %v734 = vpop.permute.xlu0 %733
          %v736 = vadd.f32 %v726, %v734
          %737 = vset.pattern.permute.xlu0 16
          %738 = vperm.xlu0 %737, %v598
          %v739 = vpop.permute.xlu0 %738
          %v741 = vmul.f32 %v599, %v739
          %743 = vrot.lane.b32.xlu0 %v741, 114
          %v744 = vpop.permute.xlu0 %743
          %v746 = vadd.f32 %v736, %v744
          %747 = vset.pattern.permute.xlu0 17
          %748 = vperm.xlu0 %747, %v598
          %v749 = vpop.permute.xlu0 %748
          %v751 = vmul.f32 %v599, %v749
          %753 = vrot.lane.b32.xlu0 %v751, 113
          %v754 = vpop.permute.xlu0 %753
          %v756 = vadd.f32 %v746, %v754
          %757 = vset.pattern.permute.xlu0 18
          %758 = vperm.xlu0 %757, %v598
          %v759 = vpop.permute.xlu0 %758
          %v761 = vmul.f32 %v599, %v759
          %763 = vrot.lane.b32.xlu0 %v761, 112
          %v764 = vpop.permute.xlu0 %763
          %v766 = vadd.f32 %v756, %v764
          %767 = vset.pattern.permute.xlu0 19
          %768 = vperm.xlu0 %767, %v598
          %v769 = vpop.permute.xlu0 %768
          %v771 = vmul.f32 %v599, %v769
          %773 = vrot.lane.b32.xlu0 %v771, 111
          %v774 = vpop.permute.xlu0 %773
          %v776 = vadd.f32 %v766, %v774
          %777 = vset.pattern.permute.xlu0 20
          %778 = vperm.xlu0 %777, %v598
          %v779 = vpop.permute.xlu0 %778
          %v781 = vmul.f32 %v599, %v779
          %783 = vrot.lane.b32.xlu0 %v781, 110
          %v784 = vpop.permute.xlu0 %783
          %v786 = vadd.f32 %v776, %v784
          %787 = vset.pattern.permute.xlu0 21
          %788 = vperm.xlu0 %787, %v598
          %v789 = vpop.permute.xlu0 %788
          %v791 = vmul.f32 %v599, %v789
          %793 = vrot.lane.b32.xlu0 %v791, 109
          %v794 = vpop.permute.xlu0 %793
          %v796 = vadd.f32 %v786, %v794
          %797 = vset.pattern.permute.xlu0 22
          %798 = vperm.xlu0 %797, %v598
          %v799 = vpop.permute.xlu0 %798
          %v801 = vmul.f32 %v599, %v799
          %803 = vrot.lane.b32.xlu0 %v801, 108
          %v804 = vpop.permute.xlu0 %803
          %v806 = vadd.f32 %v796, %v804
          %807 = vset.pattern.permute.xlu0 23
          %808 = vperm.xlu0 %807, %v598
          %v809 = vpop.permute.xlu0 %808
          %v811 = vmul.f32 %v599, %v809
          %813 = vrot.lane.b32.xlu0 %v811, 107
          %v814 = vpop.permute.xlu0 %813
          %v816 = vadd.f32 %v806, %v814
          %817 = vset.pattern.permute.xlu0 24
          %818 = vperm.xlu0 %817, %v598
          %v819 = vpop.permute.xlu0 %818
          %v821 = vmul.f32 %v599, %v819
          %823 = vrot.lane.b32.xlu0 %v821, 106
          %v824 = vpop.permute.xlu0 %823
          %v826 = vadd.f32 %v816, %v824
          %827 = vset.pattern.permute.xlu0 25
          %828 = vperm.xlu0 %827, %v598
          %v829 = vpop.permute.xlu0 %828
          %v831 = vmul.f32 %v599, %v829
          %833 = vrot.lane.b32.xlu0 %v831, 105
          %v834 = vpop.permute.xlu0 %833
          %v836 = vadd.f32 %v826, %v834
          %837 = vset.pattern.permute.xlu0 26
          %838 = vperm.xlu0 %837, %v598
          %v839 = vpop.permute.xlu0 %838
          %v841 = vmul.f32 %v599, %v839
          %843 = vrot.lane.b32.xlu0 %v841, 104
          %v844 = vpop.permute.xlu0 %843
          %v846 = vadd.f32 %v836, %v844
          %848 = vrot.lane.b32.xlu0 %v846, 12
          %v849 = vpop.permute.xlu0 %848
          %v851 = vsub.f32 %v599, %v849
          %v852 = vpack.c.bf16 %v851, %v851
          %v853 = vld [vmem:[%s2] sm:$0xf]
          %v854 = vld [vmem:[%s2 + $0x4] sm:$0xf]
          %v855 = vld [vmem:[%s3] sm:$0x1]
          %v857 = vlaneseq
          %v858 = vshrl.u32 %v857, 7
          %v859 = vsub.s32 0, %v858
          %v860 = vrot.slane %v855, %v859
          %863 = vrot.lane.b32.xlu0 %v852, 116
          %v864 = vpop.permute.xlu0 %863
          %v867 = vunpack.c.l.b16 %v853
          %v868 = vunpack.c.l.b16 %v854
          %v869 = vpack.c.b16 %v868, %v867
          %vm871 = vcmask 130048
          %v873 = vsel %vm871, %v864, 0
          %875 = vmatprep.subr.bf16.mxu0 0
          %876 = vmatpush1.bf16.msra.mxu0 %v869
          %877 = vmatprep.subr.bf16.mxu0 0
          %878 = vmatpush1.bf16.msra.mxu0 0
          %879 = vmatprep.subr.bf16.mxu0 0
          %880 = vmatpush1.bf16.msra.mxu0 0
          %881 = vmatprep.subr.bf16.mxu0 0
          %882 = vmatpush1.bf16.msra.mxu0 0
          %883 = vmatprep.subr.bf16.mxu0 0
          %884 = vmatpush1.bf16.msra.mxu0 0
          %885 = vmatprep.subr.bf16.mxu0 0
          %886 = vmatpush1.bf16.msra.mxu0 0
          %887 = vmatprep.subr.bf16.mxu0 0
          %888 = vmatpush1.bf16.msra.mxu0 0
          %889 = vmatprep.subr.bf16.mxu0 0
          %890 = vmatpush1.bf16.msra.mxu0 0
          %891 = vmatprep.subr.bf16.mxu0 0
          %892 = vmatpush1.bf16.msra.mxu0 0
          %893 = vmatprep.subr.bf16.mxu0 0
          %894 = vmatpush1.bf16.msra.mxu0 0
          %895 = vmatprep.subr.bf16.mxu0 0
          %896 = vmatpush1.bf16.msra.mxu0 0
          %897 = vmatprep.subr.bf16.mxu0 0
          %898 = vmatpush1.bf16.msra.mxu0 0
          %899 = vmatprep.subr.bf16.mxu0 0
          %900 = vmatpush1.bf16.msra.mxu0 0
          %901 = vmatprep.subr.bf16.mxu0 0
          %902 = vmatpush1.bf16.msra.mxu0 0
          %903 = vmatprep.subr.bf16.mxu0 0
          %904 = vmatpush1.bf16.msra.mxu0 0
          %905 = vmatprep.subr.bf16.mxu0 0
          %906 = vmatpush1.bf16.msra.mxu0 0
          %907 = vmatprep.mubr.bf16.mxu0 0
          %908 = vmatmul.mubr.bf16.gmra.mrb[0].mxu0 %v873
          %v909 = vpop.f32.mrb[0].mxu0
          %v910 = vadd.f32 %v860, %v909
          %v911 = vpop.f32.mrb[0].mxu0
          %v912 = vpop.f32.mrb[0].mxu0
          %v913 = vpop.f32.mrb[0].mxu0
          %914 = vdwg.mxu0
          %vm915 = vcmask 261120
          %916 = vst.msk [vmem:[#allocation2] sm:$0xff] %vm915, %v910
        $region72: #{lino_forward.1} parent=67 // pred_fallthru
          _
        %v917 = vld [vmem:[#allocation2] sm:$0xff]
        %v918 = vpack.c.bf16 %v917, %v917
        %v919 = vld [vmem:[%s513] sm:$0xf]
        %v920 = vld [vmem:[%s513 + $0x4] sm:$0xf]
        %v921 = vld [vmem:[%s513 + $0x8] sm:$0xf]
        %v922 = vld [vmem:[%s513 + $0xc] sm:$0xf]
        %v923 = vld [vmem:[%s516] sm:$0x1]
        %v925 = vlaneseq
        %v926 = vshrl.u32 %v925, 7
        %v927 = vsub.s32 0, %v926
        %v928 = vrot.slane %v923, %v927
        %v934 = vunpack.c.l.b16 %v919
        %v935 = vunpack.c.l.b16 %v920
        %v936 = vunpack.c.l.b16 %v921
        %v937 = vunpack.c.l.b16 %v922
        %v938 = vpack.c.b16 %v935, %v934
        %v939 = vpack.c.b16 %v937, %v936
        %vm942 = vcmask 261120
        %v944 = vsel %vm942, %v918, 0
        %946 = vmatprep.subr.bf16.mxu0 0
        %947 = vmatpush1.bf16.msra.mxu0 %v938
        %948 = vmatprep.subr.bf16.mxu0 0
        %949 = vmatpush1.bf16.msra.mxu0 %v939
        %950 = vmatprep.subr.bf16.mxu0 0
        %951 = vmatpush1.bf16.msra.mxu0 0
        %952 = vmatprep.subr.bf16.mxu0 0
        %953 = vmatpush1.bf16.msra.mxu0 0
        %954 = vmatprep.subr.bf16.mxu0 0
        %955 = vmatpush1.bf16.msra.mxu0 0
        %956 = vmatprep.subr.bf16.mxu0 0
        %957 = vmatpush1.bf16.msra.mxu0 0
        %958 = vmatprep.subr.bf16.mxu0 0
        %959 = vmatpush1.bf16.msra.mxu0 0
        %960 = vmatprep.subr.bf16.mxu0 0
        %961 = vmatpush1.bf16.msra.mxu0 0
        %962 = vmatprep.subr.bf16.mxu0 0
        %963 = vmatpush1.bf16.msra.mxu0 0
        %964 = vmatprep.subr.bf16.mxu0 0
        %965 = vmatpush1.bf16.msra.mxu0 0
        %966 = vmatprep.subr.bf16.mxu0 0
        %967 = vmatpush1.bf16.msra.mxu0 0
        %968 = vmatprep.subr.bf16.mxu0 0
        %969 = vmatpush1.bf16.msra.mxu0 0
        %970 = vmatprep.subr.bf16.mxu0 0
        %971 = vmatpush1.bf16.msra.mxu0 0
        %972 = vmatprep.subr.bf16.mxu0 0
        %973 = vmatpush1.bf16.msra.mxu0 0
        %974 = vmatprep.subr.bf16.mxu0 0
        %975 = vmatpush1.bf16.msra.mxu0 0
        %976 = vmatprep.subr.bf16.mxu0 0
        %977 = vmatpush1.bf16.msra.mxu0 0
        %978 = vmatprep.mubr.bf16.mxu0 0
        %979 = vmatmul.mubr.bf16.gmra.mrb[0].mxu0 %v944
        %v980 = vpop.f32.mrb[0].mxu0
        %v981 = vadd.f32 %v928, %v980
        %v982 = vpop.f32.mrb[0].mxu0
        %v983 = vpop.f32.mrb[0].mxu0
        %v984 = vpop.f32.mrb[0].mxu0
        %985 = vdwg.mxu0
        %v986 = vsub.f32 %v917, %v981
        %v987 = vpack.c.bf16 %v986, %v986
        %v988 = vld [vmem:[%s521] sm:$0xf]
        %v989 = vld [vmem:[%s521 + $0x4] sm:$0xf]
        %v990 = vld [vmem:[%s521 + $0x8] sm:$0xf]
        %v991 = vld [vmem:[%s521 + $0xc] sm:$0xf]
        %v992 = vld [vmem:[%s524] sm:$0x1]
        %v994 = vlaneseq
        %v995 = vshrl.u32 %v994, 7
        %v996 = vsub.s32 0, %v995
        %v997 = vrot.slane %v992, %v996
        %v1003 = vunpack.c.l.b16 %v988
        %v1004 = vunpack.c.l.b16 %v989
        %v1005 = vunpack.c.l.b16 %v990
        %v1006 = vunpack.c.l.b16 %v991
        %v1007 = vpack.c.b16 %v1004, %v1003
        %v1008 = vpack.c.b16 %v1006, %v1005
        %v1012 = vsel %vm942, %v987, 0
        %1014 = vmatprep.subr.bf16.mxu0 0
        %1015 = vmatpush1.bf16.msra.mxu0 %v1007
        %1016 = vmatprep.subr.bf16.mxu0 0
        %1017 = vmatpush1.bf16.msra.mxu0 %v1008
        %1018 = vmatprep.subr.bf16.mxu0 0
        %1019 = vmatpush1.bf16.msra.mxu0 0
        %1020 = vmatprep.subr.bf16.mxu0 0
        %1021 = vmatpush1.bf16.msra.mxu0 0
        %1022 = vmatprep.subr.bf16.mxu0 0
        %1023 = vmatpush1.bf16.msra.mxu0 0
        %1024 = vmatprep.subr.bf16.mxu0 0
        %1025 = vmatpush1.bf16.msra.mxu0 0
        %1026 = vmatprep.subr.bf16.mxu0 0
        %1027 = vmatpush1.bf16.msra.mxu0 0
        %1028 = vmatprep.subr.bf16.mxu0 0
        %1029 = vmatpush1.bf16.msra.mxu0 0
        %1030 = vmatprep.subr.bf16.mxu0 0
        %1031 = vmatpush1.bf16.msra.mxu0 0
        %1032 = vmatprep.subr.bf16.mxu0 0
        %1033 = vmatpush1.bf16.msra.mxu0 0
        %1034 = vmatprep.subr.bf16.mxu0 0
        %1035 = vmatpush1.bf16.msra.mxu0 0
        %1036 = vmatprep.subr.bf16.mxu0 0
        %1037 = vmatpush1.bf16.msra.mxu0 0
        %1038 = vmatprep.subr.bf16.mxu0 0
        %1039 = vmatpush1.bf16.msra.mxu0 0
        %1040 = vmatprep.subr.bf16.mxu0 0
        %1041 = vmatpush1.bf16.msra.mxu0 0
        %1042 = vmatprep.subr.bf16.mxu0 0
        %1043 = vmatpush1.bf16.msra.mxu0 0
        %1044 = vmatprep.subr.bf16.mxu0 0
        %1045 = vmatpush1.bf16.msra.mxu0 0
        %1046 = vmatprep.mubr.bf16.mxu0 0
        %1047 = vmatmul.mubr.bf16.gmra.mrb[0].mxu0 %v1012
        %v1048 = vpop.f32.mrb[0].mxu0
        %v1049 = vadd.f32 %v997, %v1048
        %v1050 = vpop.f32.mrb[0].mxu0
        %v1051 = vpop.f32.mrb[0].mxu0
        %v1052 = vpop.f32.mrb[0].mxu0
        %1053 = vdwg.mxu0
        %v1054 = vmul.f32 %v1049, %v1049
        %v1055 = vmul.f32 %v1049, %v1054
        %v1056 = vmul.f32 %v1055, 0.044715
        %v1057 = vadd.f32 %v1049, %v1056
        %v1058 = vmul.f32 %v1057, 0.7978846
        %v1059 = vtanh.pop %v1058
        %v1060 = vadd.f32 %v1059, 1.0
        %v1061 = vmul.f32 %v1060, 0.5
        %v1062 = vmul.f32 %v1049, %v1061
        %v1063 = vpack.c.bf16 %v1062, %v1062
        %v1064 = vld [vmem:[%s529] sm:$0xf]
        %v1065 = vld [vmem:[%s529 + $0x4] sm:$0xf]
        %v1066 = vld [vmem:[%s529 + $0x8] sm:$0xf]
        %v1067 = vld [vmem:[%s529 + $0xc] sm:$0xf]
        %v1068 = vld [vmem:[%s529 + $0x10] sm:$0xf]
        %v1069 = vld [vmem:[%s529 + $0x14] sm:$0xf]
        %v1070 = vld [vmem:[%s529 + $0x18] sm:$0xf]
        %v1071 = vld [vmem:[%s529 + $0x1c] sm:$0xf]
        %v1072 = vld [vmem:[%s532] sm:$0x1]
        %v1074 = vlaneseq
        %v1075 = vshrl.u32 %v1074, 7
        %v1076 = vsub.s32 0, %v1075
        %v1077 = vrot.slane %v1072, %v1076
        %v1087 = vunpack.c.l.b16 %v1064
        %v1088 = vunpack.c.l.b16 %v1065
        %v1089 = vunpack.c.l.b16 %v1066
        %v1090 = vunpack.c.l.b16 %v1067
        %v1091 = vunpack.c.l.b16 %v1068
        %v1092 = vunpack.c.l.b16 %v1069
        %v1093 = vunpack.c.l.b16 %v1070
        %v1094 = vunpack.c.l.b16 %v1071
        %v1095 = vpack.c.b16 %v1088, %v1087
        %v1096 = vpack.c.b16 %v1090, %v1089
        %v1097 = vpack.c.b16 %v1092, %v1091
        %v1098 = vpack.c.b16 %v1094, %v1093
        %vm1103 = vcmask 523264
        %v1105 = vsel %vm1103, %v1063, 0
        %1107 = vmatprep.subr.bf16.mxu0 0
        %1108 = vmatpush1.bf16.msra.mxu0 %v1095
        %1109 = vmatprep.subr.bf16.mxu0 0
        %1110 = vmatpush1.bf16.msra.mxu0 %v1096
        %1111 = vmatprep.subr.bf16.mxu0 0
        %1112 = vmatpush1.bf16.msra.mxu0 %v1097
        %1113 = vmatprep.subr.bf16.mxu0 0
        %1114 = vmatpush1.bf16.msra.mxu0 %v1098
        %1115 = vmatprep.subr.bf16.mxu0 0
        %1116 = vmatpush1.bf16.msra.mxu0 0
        %1117 = vmatprep.subr.bf16.mxu0 0
        %1118 = vmatpush1.bf16.msra.mxu0 0
        %1119 = vmatprep.subr.bf16.mxu0 0
        %1120 = vmatpush1.bf16.msra.mxu0 0
        %1121 = vmatprep.subr.bf16.mxu0 0
        %1122 = vmatpush1.bf16.msra.mxu0 0
        %1123 = vmatprep.subr.bf16.mxu0 0
        %1124 = vmatpush1.bf16.msra.mxu0 0
        %1125 = vmatprep.subr.bf16.mxu0 0
        %1126 = vmatpush1.bf16.msra.mxu0 0
        %1127 = vmatprep.subr.bf16.mxu0 0
        %1128 = vmatpush1.bf16.msra.mxu0 0
        %1129 = vmatprep.subr.bf16.mxu0 0
        %1130 = vmatpush1.bf16.msra.mxu0 0
        %1131 = vmatprep.subr.bf16.mxu0 0
        %1132 = vmatpush1.bf16.msra.mxu0 0
        %1133 = vmatprep.subr.bf16.mxu0 0
        %1134 = vmatpush1.bf16.msra.mxu0 0
        %1135 = vmatprep.subr.bf16.mxu0 0
        %1136 = vmatpush1.bf16.msra.mxu0 0
        %1137 = vmatprep.subr.bf16.mxu0 0
        %1138 = vmatpush1.bf16.msra.mxu0 0
        %1139 = vmatprep.mubr.bf16.mxu0 0
        %1140 = vmatmul.mubr.bf16.gmra.mrb[0].mxu0 %v1105
        %v1141 = vpop.f32.mrb[0].mxu0
        %v1142 = vadd.f32 %v1077, %v1141
        %v1143 = vpop.f32.mrb[0].mxu0
        %v1144 = vpop.f32.mrb[0].mxu0
        %v1145 = vpop.f32.mrb[0].mxu0
        %1146 = vdwg.mxu0
        %v1147 = vadd.f32 %v981, %v1142
        %1148 = vst.msk [vmem:[#allocation2] sm:$0xff] %vm942, %v1147
        %p1149 = scmp.eq.s32.totalorder %s29, 1
        // Predicated region
        $region73: #{lino_forward.1} parent=67 // pred_check
          %p1150 = pneg %p1149
        $region74: #{lino_forward.1} parent=67 // pred_check_branch
          %1152 = sbr.rel (%p1150) target = $region76
        $region75: #{lino_forward.1} parent=67 // pred_region
          %v1153 = vld [vmem:[#allocation2] sm:$0xff]
          %v1154 = vpack.c.bf16 %v1153, %v1153
          %v1155 = vld [vmem:[%s10] sm:$0xf]
          %v1156 = vld [vmem:[%s10 + $0x4] sm:$0xf]
          %v1157 = vld [vmem:[%s10 + $0x8] sm:$0xf]
          %v1158 = vld [vmem:[%s10 + $0xc] sm:$0xf]
          %v1159 = vld [vmem:[%s11] sm:$0x1]
          %v1161 = vlaneseq
          %v1162 = vshrl.u32 %v1161, 7
          %v1163 = vsub.s32 0, %v1162
          %v1164 = vrot.slane %v1159, %v1163
          %v1170 = vunpack.c.l.b16 %v1155
          %v1171 = vunpack.c.l.b16 %v1156
          %v1172 = vunpack.c.l.b16 %v1157
          %v1173 = vunpack.c.l.b16 %v1158
          %v1174 = vpack.c.b16 %v1171, %v1170
          %v1175 = vpack.c.b16 %v1173, %v1172
          %v1179 = vsel %vm942, %v1154, 0
          %1181 = vmatprep.subr.bf16.mxu0 0
          %1182 = vmatpush1.bf16.msra.mxu0 %v1174
          %1183 = vmatprep.subr.bf16.mxu0 0
          %1184 = vmatpush1.bf16.msra.mxu0 %v1175
          %1185 = vmatprep.subr.bf16.mxu0 0
          %1186 = vmatpush1.bf16.msra.mxu0 0
          %1187 = vmatprep.subr.bf16.mxu0 0
          %1188 = vmatpush1.bf16.msra.mxu0 0
          %1189 = vmatprep.subr.bf16.mxu0 0
          %1190 = vmatpush1.bf16.msra.mxu0 0
          %1191 = vmatprep.subr.bf16.mxu0 0
          %1192 = vmatpush1.bf16.msra.mxu0 0
          %1193 = vmatprep.subr.bf16.mxu0 0
          %1194 = vmatpush1.bf16.msra.mxu0 0
          %1195 = vmatprep.subr.bf16.mxu0 0
          %1196 = vmatpush1.bf16.msra.mxu0 0
          %1197 = vmatprep.subr.bf16.mxu0 0
          %1198 = vmatpush1.bf16.msra.mxu0 0
          %1199 = vmatprep.subr.bf16.mxu0 0
          %1200 = vmatpush1.bf16.msra.mxu0 0
          %1201 = vmatprep.subr.bf16.mxu0 0
          %1202 = vmatpush1.bf16.msra.mxu0 0
          %1203 = vmatprep.subr.bf16.mxu0 0
          %1204 = vmatpush1.bf16.msra.mxu0 0
          %1205 = vmatprep.subr.bf16.mxu0 0
          %1206 = vmatpush1.bf16.msra.mxu0 0
          %1207 = vmatprep.subr.bf16.mxu0 0
          %1208 = vmatpush1.bf16.msra.mxu0 0
          %1209 = vmatprep.subr.bf16.mxu0 0
          %1210 = vmatpush1.bf16.msra.mxu0 0
          %1211 = vmatprep.subr.bf16.mxu0 0
          %1212 = vmatpush1.bf16.msra.mxu0 0
          %1213 = vmatprep.mubr.bf16.mxu0 0
          %1214 = vmatmul.mubr.bf16.gmra.mrb[0].mxu0 %v1179
          %v1215 = vpop.f32.mrb[0].mxu0
          %v1216 = vadd.f32 %v1164, %v1215
          %v1217 = vpop.f32.mrb[0].mxu0
          %v1218 = vpop.f32.mrb[0].mxu0
          %v1219 = vpop.f32.mrb[0].mxu0
          %1220 = vdwg.mxu0
          %v1221 = vld [vmem:[#allocation4] sm:$0xff]
          %1223 = vset.pattern.permute.xlu0 0
          %1224 = vperm.xlu0 %1223, %v1221
          %v1225 = vpop.permute.xlu0 %1224
          %v1227 = vmul.f32 %v1216, %v1225
          %v1228 = vld [vmem:[#allocation5] sm:$0xff]
          %1230 = vset.pattern.permute.xlu0 0
          %1231 = vperm.xlu0 %1230, %v1228
          %v1232 = vpop.permute.xlu0 %1231
          %v1234 = vadd.f32 %v1227, %v1232
          %vm1235 = vcmask 64512
          %1236 = vst.msk [vmem:[#allocation6] sm:$0xff] %vm1235, %v1234
        $region76: #{lino_forward.1} parent=67 // pred_fallthru
          _
        // Predicated region
        $region77: #{lino_forward.1} parent=67 // pred_check
          %p1237 = pneg %p346
        $region78: #{lino_forward.1} parent=67 // pred_check_branch
          %1239 = sbr.rel (%p1237) target = $region80
        $region79: #{lino_forward.1} parent=67 // pred_region
          %s1241 = ssub.s32 128, 128
          %1242 = vsyncadd [#allocation7], %s1241
          %s1243 = smul.addr %s28, 128
          %s1244 = scalar_lea.hbm %s12, %s1243
          %s1246 = sshll.u32 [#allocation6], 4
          %s1247 = int_to_ptr.vmem [resolvable:$true] %s1246
          %1249 = dma.vmem_to_hbm [thread:$0]  %s1247, 128, %s1244, [#allocation7]
        $region80: #{lino_forward.1} parent=67 // pred_fallthru
          _
        // Predicated region
        $region81: #{lino_forward.1} parent=67 // pred_check
          %p1250 = pneg %p346
        $region82: #{lino_forward.1} parent=67 // pred_check_branch
          %1252 = sbr.rel (%p1250) target = $region84
        $region83: #{lino_forward.1} parent=67 // pred_region
          %1253 = dma.done [#allocation7], 128
        $region84: #{lino_forward.1} parent=67 // pred_fallthru
          _
      $region68: #{lino_forward.1} parent=5 // pred_fallthru
        _
      %p1254 = scmp.le.s32.totalorder 2, %s19
      // Predicated region
      $region85: #{lino_forward.1} parent=5 // pred_check
        %p1255 = pneg %p1254
      $region86: #{lino_forward.1} parent=5 // pred_check_branch
        %1257 = sbr.rel (%p1255) target = $region88
      $region87: #{lino_forward.1} parent=5 // pred_region
        %s1258 = ssub.s32 %s19, 2
      $region88: #{lino_forward.1} parent=5 // pred_fallthru
        _
    $region6: #{lino_forward.1} parent=1 // loop_footer
      %s23 = sadd.s32 1, %s19
    $region7: #{lino_forward.1} parent=1 // loop_footer_branch
      %18 = sbr.rel target = $region3
    $region8: #{lino_forward.1} parent=1 // loop_exit
      _
    %1259 = vsyncpa [#allocation7], 1
    %s1260 = scalar_lea.sflag [#allocation7], 1
    %1261 = vsyncpa %s1260, 1

</llo_original>
